<compile_context>
chip_gen: v5e
topology: v5e:2x2
jax: 0.10.0
libtpu: 0.0.40
codegen_flags: <defaults>
</compile_context>

<pallas_src>
import math

import jax
import jax.numpy as jnp
from jax.experimental import pallas as pl
from jax.experimental.pallas import tpu as pltpu

EPS = 1e-3                                   # BatchNorm2d(C, 0.001) -> eps

_VMEM_LIMIT = None


def _vmem_limit_bytes():
    """Generation-aware scoped-VMEM budget (review item)."""
    global _VMEM_LIMIT
    if _VMEM_LIMIT is None:
        try:
            cap = int(pltpu.get_tpu_info().vmem_capacity_bytes)
            _VMEM_LIMIT = min(cap * 3 // 4, 100 * 1024 * 1024)   # ~96M v5e/v6e, ~48M v7x
        except Exception:
            _VMEM_LIMIT = 48 * 1024 * 1024                       # safe everywhere
    return _VMEM_LIMIT


def _round_up(x, m):
    return -(-x // m) * m


def _pick_tm(m, target):
    return min(_round_up(m, 8), target)


# ---------------------------------------------------------------------------
# Kernel A/B: [optional previous-stage BN-apply + ReLU] -> 1x1 conv (row-tiled
# MXU matmul) -> per-tile BN partial stats.
# ---------------------------------------------------------------------------
def _make_mm_stats_kernel(tm, m_valid, need_mask, fuse_bn):
    def kernel(*refs):
        if fuse_bn:
            x_ref, s_ref, t_ref, w_ref, z_ref, stats_ref = refs
            a = jnp.maximum(x_ref[...] * s_ref[...] + t_ref[...], 0.0)
        else:
            x_ref, w_ref, z_ref, stats_ref = refs
            a = x_ref[...]
        if need_mask:  # zero rows that only exist because of row padding
            row = (pl.program_id(0) * tm
                   + jax.lax.broadcasted_iota(jnp.int32, (tm, 1), 0))
            a = a * (row < m_valid).astype(jnp.float32)
        z = jnp.dot(a, w_ref[...], preferred_element_type=jnp.float32)
        z_ref[...] = z
        s = jnp.sum(z, axis=0, keepdims=True)
        ss = jnp.sum(z * z, axis=0, keepdims=True)
        stats_ref[...] = jnp.concatenate([s, ss], axis=0)[None]
    return kernel


def conv1x1_stats(x2d, w, scale=None, shift=None, tm_target=2048):
    """z = (relu(x*scale+shift) if scale is given else x) @ w, tiled over rows.

    Returns (z[:M], stats[2, Cout]) with stats = (sum, sum-of-squares) over rows.
    """
    m, k = x2d.shape
    cout = w.shape[1]
    tm = _pick_tm(m, tm_target)
    mp = _round_up(m, tm)
    if mp != m:
        x2d = jnp.pad(x2d, ((0, mp - m), (0, 0)))
    nt = mp // tm

    x_spec = pl.BlockSpec((tm, k), lambda i: (i, 0))
    vec_spec = pl.BlockSpec((1, k), lambda i: (0, 0))
    w_spec = pl.BlockSpec((k, cout), lambda i: (0, 0))

    fuse_bn = scale is not None
    # Without the fused BN the padded rows are exact zeros -> no mask needed.
    need_mask = fuse_bn and (mp != m)
    kernel = _make_mm_stats_kernel(tm, m, need_mask, fuse_bn)
    if fuse_bn:
        in_specs, args = [x_spec, vec_spec, vec_spec, w_spec], (x2d, scale, shift, w)
    else:
        in_specs, args = [x_spec, w_spec], (x2d, w)

    z, stats = pl.pallas_call(
        kernel,
        grid=(nt,),
        in_specs=in_specs,
        out_specs=(pl.BlockSpec((tm, cout), lambda i: (i, 0)),
                   pl.BlockSpec((1, 2, cout), lambda i: (i, 0, 0))),
        out_shape=(jax.ShapeDtypeStruct((mp, cout), jnp.float32),
                   jax.ShapeDtypeStruct((nt, 2, cout), jnp.float32)),
        compiler_params=pltpu.CompilerParams(
            dimension_semantics=("parallel",),
            vmem_limit_bytes=_vmem_limit_bytes()),
    )(*args)
    return z[:m], jnp.sum(stats, axis=0)


# ---------------------------------------------------------------------------
# Kernel C: polyphase transposed conv.  BN1-apply + ReLU fused into the read,
# im2col built ONCE per image, ONE wide MXU matmul covering all st*st phases
# (merged phase weights, VMEM-resident), masked partial BN stats only when the
# output really crops.  Grid = (batch,), megacore-parallel.
# ---------------------------------------------------------------------------
def _make_deconv_kernel(H, W, C, NP, st, OH, OW, need_mask):
    def kernel(z1_ref, w_ref, s_ref, t_ref, z2_ref, stats_ref, a1p_ref):
        # Zero only the 1-px halo (the interior is fully overwritten below).
        zr = jnp.zeros((1, W + 2, C), jnp.float32)
        zc = jnp.zeros((H + 2, 1, C), jnp.float32)
        a1p_ref[0:1, :, :] = zr
        a1p_ref[H + 1:H + 2, :, :] = zr
        a1p_ref[:, 0:1, :] = zc
        a1p_ref[:, W + 1:W + 2, :] = zc
        # Fused stage-1 BN-apply + ReLU on the way in.
        a1p_ref[1:H + 1, 1:W + 1, :] = jnp.maximum(
            z1_ref[0] * s_ref[...] + t_ref[...], 0.0)

        a1p = a1p_ref[...]                                   # single hoisted load
        # im2col over the 3x3 tap window, built once -> ONE matmul, wide N dim.
        cols = [a1p[dh:dh + H, dw:dw + W, :].reshape(H * W, C)
                for dh in range(3) for dw in range(3)]
        patch = jnp.concatenate(cols, axis=1)                # [H*W, 9*C]
        z2 = jnp.dot(patch, w_ref[...],
                     preferred_element_type=jnp.float32)     # [H*W, NP*C]

        if need_mask:
            # Zero phase positions falling outside (OH, OW) so they contribute
            # zeros to the BN statistics (they are cropped in the wrapper).
            rowi = jax.lax.broadcasted_iota(jnp.int32, (H * W, NP * C), 0)
            lane = jax.lax.broadcasted_iota(jnp.int32, (H * W, NP * C), 1)
            p = lane // C
            valid = ((((rowi // W) * st + p // st) < OH)
                     & (((rowi % W) * st + p % st) < OW))
            z2 = z2 * valid.astype(jnp.float32)

        z2_ref[...] = z2[None]
        s = jnp.sum(z2, axis=0, keepdims=True)
        ss = jnp.sum(z2 * z2, axis=0, keepdims=True)
        stats_ref[...] = jnp.concatenate([s, ss], axis=0)[None]
    return kernel


def transposed_conv_stats(z1_img, w_all, scale1, shift1, st, OH, OW):
    n, h, w, c = z1_img.shape
    np_ = st * st
    need_mask = (OH < h * st) or (OW < w * st)   # trace-time specialization
    z2, stats = pl.pallas_call(
        _make_deconv_kernel(h, w, c, np_, st, OH, OW, need_mask),
        grid=(n,),
        in_specs=[pl.BlockSpec((1, h, w, c), lambda i: (i, 0, 0, 0)),
                  pl.BlockSpec((9 * c, np_ * c), lambda i: (0, 0)),  # resident
                  pl.BlockSpec((1, c), lambda i: (0, 0)),
                  pl.BlockSpec((1, c), lambda i: (0, 0))],
        out_specs=(pl.BlockSpec((1, h * w, np_ * c), lambda i: (i, 0, 0)),
                   pl.BlockSpec((1, 2, np_ * c), lambda i: (i, 0, 0))),
        out_shape=(jax.ShapeDtypeStruct((n, h * w, np_ * c), jnp.float32),
                   jax.ShapeDtypeStruct((n, 2, np_ * c), jnp.float32)),
        scratch_shapes=[pltpu.VMEM((h + 2, w + 2, c), jnp.float32)],
        compiler_params=pltpu.CompilerParams(
            dimension_semantics=("parallel",),   # halo re-zeroed every step
            vmem_limit_bytes=_vmem_limit_bytes()),
    )(z1_img, w_all, scale1, shift1)
    # Reduce partials over images and phases -> per-C4-channel BN stats.
    ps = jnp.sum(stats, axis=0).reshape(2, np_, c).sum(axis=1)
    return z2, ps


# ---------------------------------------------------------------------------
# Kernel D: final BN-apply + ReLU, run lane-dense whenever C divides 128.
# ---------------------------------------------------------------------------
def _bn_relu_kernel(z_ref, s_ref, t_ref, o_ref):
    o_ref[...] = jnp.maximum(z_ref[...] * s_ref[...] + t_ref[...], 0.0)


def _bn_relu_rows(z2d, scale, shift, tm_target):
    m, c = z2d.shape
    tm = _pick_tm(m, tm_target)
    mp = _round_up(m, tm)
    if mp != m:
        z2d = jnp.pad(z2d, ((0, mp - m), (0, 0)))
    nt = mp // tm
    out = pl.pallas_call(
        _bn_relu_kernel,
        grid=(nt,),
        in_specs=[pl.BlockSpec((tm, c), lambda i: (i, 0)),
                  pl.BlockSpec((1, c), lambda i: (0, 0)),
                  pl.BlockSpec((1, c), lambda i: (0, 0))],
        out_specs=pl.BlockSpec((tm, c), lambda i: (i, 0)),
        out_shape=jax.ShapeDtypeStruct((mp, c), jnp.float32),
        compiler_params=pltpu.CompilerParams(
            dimension_semantics=("parallel",),
            vmem_limit_bytes=_vmem_limit_bytes()),
    )(z2d, scale, shift)
    return out[:m]


def bn_relu_apply(z2d, scale, shift, tm_target=4096):
    m, c = z2d.shape
    scale = scale.reshape(1, c)
    shift = shift.reshape(1, c)
    if c < 128 and 128 % c == 0 and (m * c) % 128 == 0:
        # Lane-dense path: contiguous (free) reshape to 128-wide rows; the
        # per-channel scale/shift tiles exactly across the 128 lanes.
        reps = 128 // c
        z_flat = z2d.reshape((m * c) // 128, 128)
        s_flat = jnp.tile(scale, (1, reps))
        t_flat = jnp.tile(shift, (1, reps))
        return _bn_relu_rows(z_flat, s_flat, t_flat, tm_target).reshape(m, c)
    return _bn_relu_rows(z2d, scale, shift, tm_target)


# ---------------------------------------------------------------------------
# Parameter / weight preparation
# ---------------------------------------------------------------------------
def _deconv_weights(wt, st):
    """ConvTranspose2d weight [Cin, Cout, 3, 3] -> merged per-phase im2col
    weights [9*Cin, st*st*Cout].  For phase (ph, pw) the tap at spatial offset
    (dh, dw) in {-1,0,1}^2 carries W[:, :, kh, kw] with kh = ph + 1 - dh*st
    (likewise kw); inactive taps are zero.  Column ordering is phase-major,
    matching the [H*W, 9*Cin] patch @ W layout in the kernel."""
    ci, co = wt.shape[0], wt.shape[1]
    np_ = st * st
    w = jnp.zeros((3, 3, ci, np_, co), wt.dtype)
    for ph in range(st):
        for pw in range(st):
            p = ph * st + pw
            for kh in range(3):
                if (ph + 1 - kh) % st:
                    continue
                dh = (ph + 1 - kh) // st
                if not -1 <= dh <= 1:
                    continue
                for kw in range(3):
                    if (pw + 1 - kw) % st:
                        continue
                    dw = (pw + 1 - kw) // st
                    if not -1 <= dw <= 1:
                        continue
                    w = w.at[dh + 1, dw + 1, :, p, :].set(wt[:, :, kh, kw])
    return w.reshape(9 * ci, np_ * co)


def _bn_scale_shift(stats, count, gamma, beta):
    mean = stats[0] / count
    var = jnp.maximum(stats[1] / count - mean * mean, 0.0)   # biased variance
    scale = gamma * jax.lax.rsqrt(var + EPS)
    shift = beta - mean * scale
    return scale.reshape(1, -1), shift.reshape(1, -1)


def init_params(key, in_channels, out_channels):
    """Mirror the module init: conv weights ~ N(0, sqrt(2/(kH*kW*out_ch)));
    BN gamma=1, beta=0.  Conv biases omitted (exactly cancelled by the
    batch-stat BN that immediately follows each conv)."""
    c4 = in_channels // 4
    k1, k2, k3 = jax.random.split(key, 3)
    std1 = math.sqrt(2.0 / (1 * 1 * c4))
    stdt = math.sqrt(2.0 / (3 * 3 * c4))
    std3 = math.sqrt(2.0 / (1 * 1 * out_channels))
    return dict(
        w1=jax.random.normal(k1, (in_channels, c4), jnp.float32) * std1,
        g1=jnp.ones((c4,), jnp.float32), bt1=jnp.zeros((c4,), jnp.float32),
        # ConvTranspose2d weight, PyTorch layout [C_in, C_out, kH, kW]
        wt=jax.random.normal(k2, (c4, c4, 3, 3), jnp.float32) * stdt,
        g2=jnp.ones((c4,), jnp.float32), bt2=jnp.zeros((c4,), jnp.float32),
        w3=jax.random.normal(k3, (c4, out_channels), jnp.float32) * std3,
        g3=jnp.ones((out_channels,), jnp.float32),
        bt3=jnp.zeros((out_channels,), jnp.float32),
    )


# ---------------------------------------------------------------------------
# Forward pass (NCHW in, NCHW out)
# ---------------------------------------------------------------------------
def decoder_forward(x_nchw, params, st, adjs):
    x = jnp.transpose(x_nchw, (0, 2, 3, 1)).astype(jnp.float32)   # -> NHWC
    n, h, w, cin = x.shape
    c4 = params["w1"].shape[1]
    cout = params["w3"].shape[1]
    oh = (h - 1) * st - 2 + 3 + adjs
    ow = (w - 1) * st - 2 + 3 + adjs
    np_ = st * st

    # Stage 1: 1x1 conv tiled over N*H*W rows + fused BN partial stats.
    m1 = n * h * w
    z1, ps1 = conv1x1_stats(x.reshape(m1, cin), params["w1"])
    s1, t1 = _bn_scale_shift(ps1, m1, params["g1"], params["bt1"])

    # Stage 2: polyphase transposed conv, all phases in one wide matmul.
    w_all = _deconv_weights(params["wt"], st)
    z2, ps2 = transposed_conv_stats(z1.reshape(n, h, w, c4), w_all, s1, t1,
                                    st, oh, ow)
    s2, t2 = _bn_scale_shift(ps2, n * oh * ow, params["g2"], params["bt2"])

    crops = (oh < h * st) or (ow < w * st)
    if not crops:
        # Fast path (adjs == st-1, the usual LinkNet config): stage 3 runs
        # directly on the phase-major layout (pixel-permutation invariant);
        # the single phase interleave is fused with the final NCHW transpose.
        m2 = n * h * w * np_                                   # == n*oh*ow
        z3, ps3 = conv1x1_stats(z2.reshape(m2, c4), params["w3"],
                                scale=s2, shift=t2)
        s3, t3 = _bn_scale_shift(ps3, m2, params["g3"], params["bt3"])
        y = bn_relu_apply(z3, s3, t3).reshape(n, h, w, st, st, cout)
        return y.transpose(0, 5, 1, 3, 2, 4).reshape(n, cout, oh, ow)

    # General path: output_padding crops some phase positions -> interleave &
    # crop first (invalid positions were zero-masked in the kernel stats).
    z2_img = (z2.reshape(n, h, w, st, st, c4)
                .transpose(0, 1, 3, 2, 4, 5)
                .reshape(n, h * st, w * st, c4)[:, :oh, :ow, :])
    m2 = n * oh * ow
    z3, ps3 = conv1x1_stats(z2_img.reshape(m2, c4), params["w3"],
                            scale=s2, shift=t2)
    s3, t3 = _bn_scale_shift(ps3, m2, params["g3"], params["bt3"])
    y = bn_relu_apply(z3, s3, t3).reshape(n, oh, ow, cout)
    return jnp.transpose(y, (0, 3, 1, 2))


# ---------------------------------------------------------------------------
# Pure-XLA reference (dilate + flipped-kernel conv) for validation.
# ---------------------------------------------------------------------------
def reference_forward(x_nchw, params, st, adjs):
    x = jnp.transpose(x_nchw, (0, 2, 3, 1)).astype(jnp.float32)

    def bn_relu(z, g, b):
        mean = jnp.mean(z, axis=(0, 1, 2))
        var = jnp.var(z, axis=(0, 1, 2))
        return jnp.maximum((z - mean) * jax.lax.rsqrt(var + EPS) * g + b, 0.0)

    a1 = bn_relu(jnp.einsum("nhwc,cd->nhwd", x, params["w1"]),
                 params["g1"], params["bt1"])
    w_flip = jnp.flip(params["wt"], axis=(2, 3)).transpose(2, 3, 0, 1)  # HWIO
    z2 = jax.lax.conv_general_dilated(
        a1, w_flip, window_strides=(1, 1),
        padding=((1, 1 + adjs), (1, 1 + adjs)),
        lhs_dilation=(st, st),
        dimension_numbers=("NHWC", "HWIO", "NHWC"))
    a2 = bn_relu(z2, params["g2"], params["bt2"])
    a3 = bn_relu(jnp.einsum("nhwc,cd->nhwd", a2, params["w3"]),
                 params["g3"], params["bt3"])
    return jnp.transpose(a3, (0, 3, 1, 2))


if __name__ == "__main__":
    key = jax.random.PRNGKey(0)
    kx, kp = jax.random.split(key)

    in_channels, out_channels, st, adjs = 32, 16, 2, 1
    n, h, w = 2, 8, 8

    x = jax.random.normal(kx, (n, in_channels, h, w), jnp.float32)
    params = init_params(kp, in_channels, out_channels)

    fwd = jax.jit(lambda xx: decoder_forward(xx, params, st, adjs))
    out = fwd(x)
    jax.block_until_ready(out)

    expected_hw = (h - 1) * st - 2 + 3 + adjs
    assert out.shape == (n, out_channels, expected_hw, expected_hw), out.shape

    ref = reference_forward(x, params, st, adjs)
    err = float(jnp.max(jnp.abs(out - ref)))
    assert err < 2e-3, f"max abs error vs reference: {err}"

    print("KERNEL_OK")
</pallas_src>

<mosaic_0001>
module attributes {stable_mosaic.version = 11 : i64} {
  func.func @kernel(%arg0: i32, %arg1: memref<128x32xf32, #tpu.memory_space<vmem>>, %arg2: memref<32x8xf32, #tpu.memory_space<vmem>>, %arg3: memref<128x8xf32, #tpu.memory_space<vmem>>, %arg4: memref<1x2x8xf32, #tpu.memory_space<vmem>>) attributes {dimension_semantics = [#tpu.dimension_semantics<parallel>], iteration_bounds = array<i64: 1>, scalar_prefetch = 0 : i64, scratch_operands = 0 : i64, tpu.core_type = #tpu.core_type<tc>, window_params = [{transform_indices = @transform_0, window_bounds = array<i64: 128, 32>}, {pipeline_mode = #tpu.pipeline_mode<synchronous>, transform_indices = @transform_1, window_bounds = array<i64: 32, 8>}, {transform_indices = @transform_2, window_bounds = array<i64: 128, 8>}, {transform_indices = @transform_3, window_bounds = array<i64: 1, 2, 8>}]} {
    %c0 = arith.constant 0 : index
    %c0_0 = arith.constant 0 : index
    %0 = vector.load %arg1[%c0, %c0_0] : memref<128x32xf32, #tpu.memory_space<vmem>>, vector<128x32xf32>
    %c0_1 = arith.constant 0 : index
    %c0_2 = arith.constant 0 : index
    %1 = vector.load %arg2[%c0_1, %c0_2] : memref<32x8xf32, #tpu.memory_space<vmem>>, vector<32x8xf32>
    %cst = arith.constant dense<0.000000e+00> : vector<128x8xf32>
    %2 = tpu.matmul %0, %1, %cst {dimension_numbers = #tpu.dot_dimension_numbers<[1], [0], [0], [1], [0, 0, 1, 1], [], []>} : vector<128x32xf32>, vector<32x8xf32>, vector<128x8xf32> -> vector<128x8xf32>
    %c0_3 = arith.constant 0 : index
    %c0_4 = arith.constant 0 : index
    %3 = vector.load %arg3[%c0_3, %c0_4] : memref<128x8xf32, #tpu.memory_space<vmem>>, vector<128x8xf32>
    tpu.vector_store %arg3[%c0_3, %c0_4], %2 {strides = array<i32>} : memref<128x8xf32, #tpu.memory_space<vmem>>, vector<128x8xf32>,
    %cst_5 = arith.constant dense<0.000000e+00> : vector<8xf32>
    %4 = vector.multi_reduction <add>, %2, %cst_5 [0] : vector<128x8xf32> to vector<8xf32>
    %5 = vector.shape_cast %4 : vector<8xf32> to vector<1x8xf32>
    %6 = arith.mulf %2, %2 : vector<128x8xf32>
    %cst_6 = arith.constant dense<0.000000e+00> : vector<8xf32>
    %7 = vector.multi_reduction <add>, %6, %cst_6 [0] : vector<128x8xf32> to vector<8xf32>
    %8 = vector.shape_cast %7 : vector<8xf32> to vector<1x8xf32>
    %9 = tpu.concatenate %5, %8 in 0 : vector<1x8xf32>, vector<1x8xf32> -> vector<2x8xf32>
    %10 = vector.shape_cast %9 : vector<2x8xf32> to vector<1x2x8xf32>
    %c0_7 = arith.constant 0 : index
    %c0_8 = arith.constant 0 : index
    %c0_9 = arith.constant 0 : index
    %11 = vector.load %arg4[%c0_7, %c0_8, %c0_9] : memref<1x2x8xf32, #tpu.memory_space<vmem>>, vector<1x2x8xf32>
    tpu.vector_store %arg4[%c0_7, %c0_8, %c0_9], %10 {strides = array<i32>} : memref<1x2x8xf32, #tpu.memory_space<vmem>>, vector<1x2x8xf32>,
    return
  }
  func.func @transform_0(%arg0: i32) -> (i32, i32) {
    %c0_i32 = arith.constant 0 : i32
    %c0_i32_0 = arith.constant 0 : i32
    return %arg0, %c0_i32 : i32, i32
  }
  func.func @transform_1(%arg0: i32) -> (i32, i32) {
    %c0_i32 = arith.constant 0 : i32
    %c0_i32_0 = arith.constant 0 : i32
    %c0_i32_1 = arith.constant 0 : i32
    return %c0_i32, %c0_i32_0 : i32, i32
  }
  func.func @transform_2(%arg0: i32) -> (i32, i32) {
    %c0_i32 = arith.constant 0 : i32
    %c0_i32_0 = arith.constant 0 : i32
    return %arg0, %c0_i32 : i32, i32
  }
  func.func @transform_3(%arg0: i32) -> (i32, i32, i32) {
    %c0_i32 = arith.constant 0 : i32
    %c0_i32_0 = arith.constant 0 : i32
    %c0_i32_1 = arith.constant 0 : i32
    return %arg0, %c0_i32, %c0_i32_0 : i32, i32, i32
  }
}

module attributes {stable_mosaic.version = 11 : i64} {
  func.func @kernel(%arg0: i32, %arg1: memref<1x8x8x8xf32, #tpu.memory_space<vmem>>, %arg2: memref<72x32xf32, #tpu.memory_space<vmem>>, %arg3: memref<1x8xf32, #tpu.memory_space<vmem>>, %arg4: memref<1x8xf32, #tpu.memory_space<vmem>>, %arg5: memref<1x64x32xf32, #tpu.memory_space<vmem>>, %arg6: memref<1x2x32xf32, #tpu.memory_space<vmem>>, %arg7: memref<10x10x8xf32, #tpu.memory_space<vmem>>) attributes {dimension_semantics = [#tpu.dimension_semantics<parallel>], iteration_bounds = array<i64: 2>, scalar_prefetch = 0 : i64, scratch_operands = 1 : i64, tpu.core_type = #tpu.core_type<tc>, window_params = [{transform_indices = @transform_0, window_bounds = array<i64: 1, 8, 8, 8>}, {pipeline_mode = #tpu.pipeline_mode<synchronous>, transform_indices = @transform_1, window_bounds = array<i64: 72, 32>}, {pipeline_mode = #tpu.pipeline_mode<synchronous>, transform_indices = @transform_2, window_bounds = array<i64: 1, 8>}, {pipeline_mode = #tpu.pipeline_mode<synchronous>, transform_indices = @transform_3, window_bounds = array<i64: 1, 8>}, {transform_indices = @transform_4, window_bounds = array<i64: 1, 64, 32>}, {transform_indices = @transform_5, window_bounds = array<i64: 1, 2, 32>}]} {
    %cst = arith.constant 0.000000e+00 : f32
    %0 = vector.broadcast %cst : f32 to vector<1x10x8xf32>
    %cst_0 = arith.constant 0.000000e+00 : f32
    %1 = vector.broadcast %cst_0 : f32 to vector<10x1x8xf32>
    %c0 = arith.constant 0 : index
    %c0_1 = arith.constant 0 : index
    %c0_2 = arith.constant 0 : index
    %2 = vector.load %arg7[%c0, %c0_1, %c0_2] : memref<10x10x8xf32, #tpu.memory_space<vmem>>, vector<1x10x8xf32>
    tpu.vector_store %arg7[%c0, %c0_1, %c0_2], %0 {strides = array<i32>} : memref<10x10x8xf32, #tpu.memory_space<vmem>>, vector<1x10x8xf32>,
    %c9 = arith.constant 9 : index
    %c0_3 = arith.constant 0 : index
    %c0_4 = arith.constant 0 : index
    %3 = vector.load %arg7[%c9, %c0_3, %c0_4] : memref<10x10x8xf32, #tpu.memory_space<vmem>>, vector<1x10x8xf32>
    tpu.vector_store %arg7[%c9, %c0_3, %c0_4], %0 {strides = array<i32>} : memref<10x10x8xf32, #tpu.memory_space<vmem>>, vector<1x10x8xf32>,
    %c0_5 = arith.constant 0 : index
    %c0_6 = arith.constant 0 : index
    %c0_7 = arith.constant 0 : index
    %4 = vector.load %arg7[%c0_5, %c0_6, %c0_7] : memref<10x10x8xf32, #tpu.memory_space<vmem>>, vector<10x1x8xf32>
    tpu.vector_store %arg7[%c0_5, %c0_6, %c0_7], %1 {strides = array<i32>} : memref<10x10x8xf32, #tpu.memory_space<vmem>>, vector<10x1x8xf32>,
    %c0_8 = arith.constant 0 : index
    %c9_9 = arith.constant 9 : index
    %c0_10 = arith.constant 0 : index
    %5 = vector.load %arg7[%c0_8, %c9_9, %c0_10] : memref<10x10x8xf32, #tpu.memory_space<vmem>>, vector<10x1x8xf32>
    tpu.vector_store %arg7[%c0_8, %c9_9, %c0_10], %1 {strides = array<i32>} : memref<10x10x8xf32, #tpu.memory_space<vmem>>, vector<10x1x8xf32>,
    %c0_11 = arith.constant 0 : index
    %c0_12 = arith.constant 0 : index
    %c0_13 = arith.constant 0 : index
    %c0_14 = arith.constant 0 : index
    %6 = vector.load %arg1[%c0_11, %c0_12, %c0_13, %c0_14] : memref<1x8x8x8xf32, #tpu.memory_space<vmem>>, vector<1x8x8x8xf32>
    %7 = vector.shape_cast %6 : vector<1x8x8x8xf32> to vector<8x8x8xf32>
    %c0_15 = arith.constant 0 : index
    %c0_16 = arith.constant 0 : index
    %8 = vector.load %arg3[%c0_15, %c0_16] : memref<1x8xf32, #tpu.memory_space<vmem>>, vector<1x8xf32>
    %9 = vector.shape_cast %8 : vector<1x8xf32> to vector<1x1x8xf32>
    %10 = vector.broadcast %9 : vector<1x1x8xf32> to vector<8x8x8xf32>
    %11 = arith.mulf %7, %10 : vector<8x8x8xf32>
    %c0_17 = arith.constant 0 : index
    %c0_18 = arith.constant 0 : index
    %12 = vector.load %arg4[%c0_17, %c0_18] : memref<1x8xf32, #tpu.memory_space<vmem>>, vector<1x8xf32>
    %13 = vector.shape_cast %12 : vector<1x8xf32> to vector<1x1x8xf32>
    %14 = vector.broadcast %13 : vector<1x1x8xf32> to vector<8x8x8xf32>
    %15 = arith.addf %11, %14 : vector<8x8x8xf32>
    %cst_19 = arith.constant 0.000000e+00 : f32
    %16 = vector.broadcast %cst_19 : f32 to vector<8x8x8xf32>
    %17 = arith.maximumf %15, %16 : vector<8x8x8xf32>
    %c1 = arith.constant 1 : index
    %c1_20 = arith.constant 1 : index
    %c0_21 = arith.constant 0 : index
    %18 = vector.load %arg7[%c1, %c1_20, %c0_21] : memref<10x10x8xf32, #tpu.memory_space<vmem>>, vector<8x8x8xf32>
    tpu.vector_store %arg7[%c1, %c1_20, %c0_21], %17 {strides = array<i32>} : memref<10x10x8xf32, #tpu.memory_space<vmem>>, vector<8x8x8xf32>,
    %c0_22 = arith.constant 0 : index
    %c0_23 = arith.constant 0 : index
    %c0_24 = arith.constant 0 : index
    %19 = vector.load %arg7[%c0_22, %c0_23, %c0_24] : memref<10x10x8xf32, #tpu.memory_space<vmem>>, vector<10x10x8xf32>
    %20 = vector.extract_strided_slice %19 {offsets = [0, 0, 0], sizes = [8, 8, 8], strides = [1, 1, 1]} : vector<10x10x8xf32> to vector<8x8x8xf32>
    %21 = vector.shape_cast %20 : vector<8x8x8xf32> to vector<64x8xf32>
    %22 = vector.extract_strided_slice %19 {offsets = [0, 1, 0], sizes = [8, 8, 8], strides = [1, 1, 1]} : vector<10x10x8xf32> to vector<8x8x8xf32>
    %23 = vector.shape_cast %22 : vector<8x8x8xf32> to vector<64x8xf32>
    %24 = vector.extract_strided_slice %19 {offsets = [0, 2, 0], sizes = [8, 8, 8], strides = [1, 1, 1]} : vector<10x10x8xf32> to vector<8x8x8xf32>
    %25 = vector.shape_cast %24 : vector<8x8x8xf32> to vector<64x8xf32>
    %26 = vector.extract_strided_slice %19 {offsets = [1, 0, 0], sizes = [8, 8, 8], strides = [1, 1, 1]} : vector<10x10x8xf32> to vector<8x8x8xf32>
    %27 = vector.shape_cast %26 : vector<8x8x8xf32> to vector<64x8xf32>
    %28 = vector.extract_strided_slice %19 {offsets = [1, 1, 0], sizes = [8, 8, 8], strides = [1, 1, 1]} : vector<10x10x8xf32> to vector<8x8x8xf32>
    %29 = vector.shape_cast %28 : vector<8x8x8xf32> to vector<64x8xf32>
    %30 = vector.extract_strided_slice %19 {offsets = [1, 2, 0], sizes = [8, 8, 8], strides = [1, 1, 1]} : vector<10x10x8xf32> to vector<8x8x8xf32>
    %31 = vector.shape_cast %30 : vector<8x8x8xf32> to vector<64x8xf32>
    %32 = vector.extract_strided_slice %19 {offsets = [2, 0, 0], sizes = [8, 8, 8], strides = [1, 1, 1]} : vector<10x10x8xf32> to vector<8x8x8xf32>
    %33 = vector.shape_cast %32 : vector<8x8x8xf32> to vector<64x8xf32>
    %34 = vector.extract_strided_slice %19 {offsets = [2, 1, 0], sizes = [8, 8, 8], strides = [1, 1, 1]} : vector<10x10x8xf32> to vector<8x8x8xf32>
    %35 = vector.shape_cast %34 : vector<8x8x8xf32> to vector<64x8xf32>
    %36 = vector.extract_strided_slice %19 {offsets = [2, 2, 0], sizes = [8, 8, 8], strides = [1, 1, 1]} : vector<10x10x8xf32> to vector<8x8x8xf32>
    %37 = vector.shape_cast %36 : vector<8x8x8xf32> to vector<64x8xf32>
    %38 = tpu.concatenate %21, %23, %25, %27, %29, %31, %33, %35, %37 in 1 : vector<64x8xf32>, vector<64x8xf32>, vector<64x8xf32>, vector<64x8xf32>, vector<64x8xf32>, vector<64x8xf32>, vector<64x8xf32>, vector<64x8xf32>, vector<64x8xf32> -> vector<64x72xf32>
    %c0_25 = arith.constant 0 : index
    %c0_26 = arith.constant 0 : index
    %39 = vector.load %arg2[%c0_25, %c0_26] : memref<72x32xf32, #tpu.memory_space<vmem>>, vector<72x32xf32>
    %cst_27 = arith.constant dense<0.000000e+00> : vector<64x32xf32>
    %40 = tpu.matmul %38, %39, %cst_27 {dimension_numbers = #tpu.dot_dimension_numbers<[1], [0], [0], [1], [0, 0, 1, 1], [], []>} : vector<64x72xf32>, vector<72x32xf32>, vector<64x32xf32> -> vector<64x32xf32>
    %41 = vector.shape_cast %40 : vector<64x32xf32> to vector<1x64x32xf32>
    %c0_28 = arith.constant 0 : index
    %c0_29 = arith.constant 0 : index
    %c0_30 = arith.constant 0 : index
    %42 = vector.load %arg5[%c0_28, %c0_29, %c0_30] : memref<1x64x32xf32, #tpu.memory_space<vmem>>, vector<1x64x32xf32>
    tpu.vector_store %arg5[%c0_28, %c0_29, %c0_30], %41 {strides = array<i32>} : memref<1x64x32xf32, #tpu.memory_space<vmem>>, vector<1x64x32xf32>,
    %cst_31 = arith.constant dense<0.000000e+00> : vector<32xf32>
    %43 = vector.multi_reduction <add>, %40, %cst_31 [0] : vector<64x32xf32> to vector<32xf32>
    %44 = vector.shape_cast %43 : vector<32xf32> to vector<1x32xf32>
    %45 = arith.mulf %40, %40 : vector<64x32xf32>
    %cst_32 = arith.constant dense<0.000000e+00> : vector<32xf32>
    %46 = vector.multi_reduction <add>, %45, %cst_32 [0] : vector<64x32xf32> to vector<32xf32>
    %47 = vector.shape_cast %46 : vector<32xf32> to vector<1x32xf32>
    %48 = tpu.concatenate %44, %47 in 0 : vector<1x32xf32>, vector<1x32xf32> -> vector<2x32xf32>
    %49 = vector.shape_cast %48 : vector<2x32xf32> to vector<1x2x32xf32>
    %c0_33 = arith.constant 0 : index
    %c0_34 = arith.constant 0 : index
    %c0_35 = arith.constant 0 : index
    %50 = vector.load %arg6[%c0_33, %c0_34, %c0_35] : memref<1x2x32xf32, #tpu.memory_space<vmem>>, vector<1x2x32xf32>
    tpu.vector_store %arg6[%c0_33, %c0_34, %c0_35], %49 {strides = array<i32>} : memref<1x2x32xf32, #tpu.memory_space<vmem>>, vector<1x2x32xf32>,
    return
  }
  func.func @transform_0(%arg0: i32) -> (i32, i32, i32, i32) {
    %c0_i32 = arith.constant 0 : i32
    %c0_i32_0 = arith.constant 0 : i32
    %c0_i32_1 = arith.constant 0 : i32
    %c0_i32_2 = arith.constant 0 : i32
    return %arg0, %c0_i32, %c0_i32_0, %c0_i32_1 : i32, i32, i32, i32
  }
  func.func @transform_1(%arg0: i32) -> (i32, i32) {
    %c0_i32 = arith.constant 0 : i32
    %c0_i32_0 = arith.constant 0 : i32
    %c0_i32_1 = arith.constant 0 : i32
    return %c0_i32, %c0_i32_0 : i32, i32
  }
  func.func @transform_2(%arg0: i32) -> (i32, i32) {
    %c0_i32 = arith.constant 0 : i32
    %c0_i32_0 = arith.constant 0 : i32
    %c0_i32_1 = arith.constant 0 : i32
    return %c0_i32, %c0_i32_0 : i32, i32
  }
  func.func @transform_3(%arg0: i32) -> (i32, i32) {
    %c0_i32 = arith.constant 0 : i32
    %c0_i32_0 = arith.constant 0 : i32
    %c0_i32_1 = arith.constant 0 : i32
    return %c0_i32, %c0_i32_0 : i32, i32
  }
  func.func @transform_4(%arg0: i32) -> (i32, i32, i32) {
    %c0_i32 = arith.constant 0 : i32
    %c0_i32_0 = arith.constant 0 : i32
    %c0_i32_1 = arith.constant 0 : i32
    return %arg0, %c0_i32, %c0_i32_0 : i32, i32, i32
  }
  func.func @transform_5(%arg0: i32) -> (i32, i32, i32) {
    %c0_i32 = arith.constant 0 : i32
    %c0_i32_0 = arith.constant 0 : i32
    %c0_i32_1 = arith.constant 0 : i32
    return %arg0, %c0_i32, %c0_i32_0 : i32, i32, i32
  }
}

module attributes {stable_mosaic.version = 11 : i64} {
  func.func @kernel(%arg0: i32, %arg1: memref<512x8xf32, #tpu.memory_space<vmem>>, %arg2: memref<1x8xf32, #tpu.memory_space<vmem>>, %arg3: memref<1x8xf32, #tpu.memory_space<vmem>>, %arg4: memref<8x16xf32, #tpu.memory_space<vmem>>, %arg5: memref<512x16xf32, #tpu.memory_space<vmem>>, %arg6: memref<1x2x16xf32, #tpu.memory_space<vmem>>) attributes {dimension_semantics = [#tpu.dimension_semantics<parallel>], iteration_bounds = array<i64: 1>, scalar_prefetch = 0 : i64, scratch_operands = 0 : i64, tpu.core_type = #tpu.core_type<tc>, window_params = [{transform_indices = @transform_0, window_bounds = array<i64: 512, 8>}, {pipeline_mode = #tpu.pipeline_mode<synchronous>, transform_indices = @transform_1, window_bounds = array<i64: 1, 8>}, {pipeline_mode = #tpu.pipeline_mode<synchronous>, transform_indices = @transform_2, window_bounds = array<i64: 1, 8>}, {pipeline_mode = #tpu.pipeline_mode<synchronous>, transform_indices = @transform_3, window_bounds = array<i64: 8, 16>}, {transform_indices = @transform_4, window_bounds = array<i64: 512, 16>}, {transform_indices = @transform_5, window_bounds = array<i64: 1, 2, 16>}]} {
    %c0 = arith.constant 0 : index
    %c0_0 = arith.constant 0 : index
    %0 = vector.load %arg1[%c0, %c0_0] : memref<512x8xf32, #tpu.memory_space<vmem>>, vector<512x8xf32>
    %c0_1 = arith.constant 0 : index
    %c0_2 = arith.constant 0 : index
    %1 = vector.load %arg2[%c0_1, %c0_2] : memref<1x8xf32, #tpu.memory_space<vmem>>, vector<1x8xf32>
    %2 = vector.broadcast %1 : vector<1x8xf32> to vector<512x8xf32>
    %3 = arith.mulf %0, %2 : vector<512x8xf32>
    %c0_3 = arith.constant 0 : index
    %c0_4 = arith.constant 0 : index
    %4 = vector.load %arg3[%c0_3, %c0_4] : memref<1x8xf32, #tpu.memory_space<vmem>>, vector<1x8xf32>
    %5 = vector.broadcast %4 : vector<1x8xf32> to vector<512x8xf32>
    %6 = arith.addf %3, %5 : vector<512x8xf32>
    %cst = arith.constant 0.000000e+00 : f32
    %7 = vector.broadcast %cst : f32 to vector<512x8xf32>
    %8 = arith.maximumf %6, %7 : vector<512x8xf32>
    %c0_5 = arith.constant 0 : index
    %c0_6 = arith.constant 0 : index
    %9 = vector.load %arg4[%c0_5, %c0_6] : memref<8x16xf32, #tpu.memory_space<vmem>>, vector<8x16xf32>
    %cst_7 = arith.constant dense<0.000000e+00> : vector<512x16xf32>
    %10 = tpu.matmul %8, %9, %cst_7 {dimension_numbers = #tpu.dot_dimension_numbers<[1], [0], [0], [1], [0, 0, 1, 1], [], []>} : vector<512x8xf32>, vector<8x16xf32>, vector<512x16xf32> -> vector<512x16xf32>
    %c0_8 = arith.constant 0 : index
    %c0_9 = arith.constant 0 : index
    %11 = vector.load %arg5[%c0_8, %c0_9] : memref<512x16xf32, #tpu.memory_space<vmem>>, vector<512x16xf32>
    tpu.vector_store %arg5[%c0_8, %c0_9], %10 {strides = array<i32>} : memref<512x16xf32, #tpu.memory_space<vmem>>, vector<512x16xf32>,
    %cst_10 = arith.constant dense<0.000000e+00> : vector<16xf32>
    %12 = vector.multi_reduction <add>, %10, %cst_10 [0] : vector<512x16xf32> to vector<16xf32>
    %13 = vector.shape_cast %12 : vector<16xf32> to vector<1x16xf32>
    %14 = arith.mulf %10, %10 : vector<512x16xf32>
    %cst_11 = arith.constant dense<0.000000e+00> : vector<16xf32>
    %15 = vector.multi_reduction <add>, %14, %cst_11 [0] : vector<512x16xf32> to vector<16xf32>
    %16 = vector.shape_cast %15 : vector<16xf32> to vector<1x16xf32>
    %17 = tpu.concatenate %13, %16 in 0 : vector<1x16xf32>, vector<1x16xf32> -> vector<2x16xf32>
    %18 = vector.shape_cast %17 : vector<2x16xf32> to vector<1x2x16xf32>
    %c0_12 = arith.constant 0 : index
    %c0_13 = arith.constant 0 : index
    %c0_14 = arith.constant 0 : index
    %19 = vector.load %arg6[%c0_12, %c0_13, %c0_14] : memref<1x2x16xf32, #tpu.memory_space<vmem>>, vector<1x2x16xf32>
    tpu.vector_store %arg6[%c0_12, %c0_13, %c0_14], %18 {strides = array<i32>} : memref<1x2x16xf32, #tpu.memory_space<vmem>>, vector<1x2x16xf32>,
    return
  }
  func.func @transform_0(%arg0: i32) -> (i32, i32) {
    %c0_i32 = arith.constant 0 : i32
    %c0_i32_0 = arith.constant 0 : i32
    return %arg0, %c0_i32 : i32, i32
  }
  func.func @transform_1(%arg0: i32) -> (i32, i32) {
    %c0_i32 = arith.constant 0 : i32
    %c0_i32_0 = arith.constant 0 : i32
    %c0_i32_1 = arith.constant 0 : i32
    return %c0_i32, %c0_i32_0 : i32, i32
  }
  func.func @transform_2(%arg0: i32) -> (i32, i32) {
    %c0_i32 = arith.constant 0 : i32
    %c0_i32_0 = arith.constant 0 : i32
    %c0_i32_1 = arith.constant 0 : i32
    return %c0_i32, %c0_i32_0 : i32, i32
  }
  func.func @transform_3(%arg0: i32) -> (i32, i32) {
    %c0_i32 = arith.constant 0 : i32
    %c0_i32_0 = arith.constant 0 : i32
    %c0_i32_1 = arith.constant 0 : i32
    return %c0_i32, %c0_i32_0 : i32, i32
  }
  func.func @transform_4(%arg0: i32) -> (i32, i32) {
    %c0_i32 = arith.constant 0 : i32
    %c0_i32_0 = arith.constant 0 : i32
    return %arg0, %c0_i32 : i32, i32
  }
  func.func @transform_5(%arg0: i32) -> (i32, i32, i32) {
    %c0_i32 = arith.constant 0 : i32
    %c0_i32_0 = arith.constant 0 : i32
    %c0_i32_1 = arith.constant 0 : i32
    return %arg0, %c0_i32, %c0_i32_0 : i32, i32, i32
  }
}

module attributes {stable_mosaic.version = 11 : i64} {
  func.func @_bn_relu_kernel(%arg0: i32, %arg1: memref<64x128xf32, #tpu.memory_space<vmem>>, %arg2: memref<1x128xf32, #tpu.memory_space<vmem>>, %arg3: memref<1x128xf32, #tpu.memory_space<vmem>>, %arg4: memref<64x128xf32, #tpu.memory_space<vmem>>) attributes {dimension_semantics = [#tpu.dimension_semantics<parallel>], iteration_bounds = array<i64: 1>, scalar_prefetch = 0 : i64, scratch_operands = 0 : i64, tpu.core_type = #tpu.core_type<tc>, window_params = [{transform_indices = @transform_0, window_bounds = array<i64: 64, 128>}, {pipeline_mode = #tpu.pipeline_mode<synchronous>, transform_indices = @transform_1, window_bounds = array<i64: 1, 128>}, {pipeline_mode = #tpu.pipeline_mode<synchronous>, transform_indices = @transform_2, window_bounds = array<i64: 1, 128>}, {transform_indices = @transform_3, window_bounds = array<i64: 64, 128>}]} {
    %c0 = arith.constant 0 : index
    %c0_0 = arith.constant 0 : index
    %0 = vector.load %arg1[%c0, %c0_0] : memref<64x128xf32, #tpu.memory_space<vmem>>, vector<64x128xf32>
    %c0_1 = arith.constant 0 : index
    %c0_2 = arith.constant 0 : index
    %1 = vector.load %arg2[%c0_1, %c0_2] : memref<1x128xf32, #tpu.memory_space<vmem>>, vector<1x128xf32>
    %2 = vector.broadcast %1 : vector<1x128xf32> to vector<64x128xf32>
    %3 = arith.mulf %0, %2 : vector<64x128xf32>
    %c0_3 = arith.constant 0 : index
    %c0_4 = arith.constant 0 : index
    %4 = vector.load %arg3[%c0_3, %c0_4] : memref<1x128xf32, #tpu.memory_space<vmem>>, vector<1x128xf32>
    %5 = vector.broadcast %4 : vector<1x128xf32> to vector<64x128xf32>
    %6 = arith.addf %3, %5 : vector<64x128xf32>
    %cst = arith.constant 0.000000e+00 : f32
    %7 = vector.broadcast %cst : f32 to vector<64x128xf32>
    %8 = arith.maximumf %6, %7 : vector<64x128xf32>
    %c0_5 = arith.constant 0 : index
    %c0_6 = arith.constant 0 : index
    %9 = vector.load %arg4[%c0_5, %c0_6] : memref<64x128xf32, #tpu.memory_space<vmem>>, vector<64x128xf32>
    tpu.vector_store %arg4[%c0_5, %c0_6], %8 {strides = array<i32>} : memref<64x128xf32, #tpu.memory_space<vmem>>, vector<64x128xf32>,
    return
  }
  func.func @transform_0(%arg0: i32) -> (i32, i32) {
    %c0_i32 = arith.constant 0 : i32
    %c0_i32_0 = arith.constant 0 : i32
    return %arg0, %c0_i32 : i32, i32
  }
  func.func @transform_1(%arg0: i32) -> (i32, i32) {
    %c0_i32 = arith.constant 0 : i32
    %c0_i32_0 = arith.constant 0 : i32
    %c0_i32_1 = arith.constant 0 : i32
    return %c0_i32, %c0_i32_0 : i32, i32
  }
  func.func @transform_2(%arg0: i32) -> (i32, i32) {
    %c0_i32 = arith.constant 0 : i32
    %c0_i32_0 = arith.constant 0 : i32
    %c0_i32_1 = arith.constant 0 : i32
    return %c0_i32, %c0_i32_0 : i32, i32
  }
  func.func @transform_3(%arg0: i32) -> (i32, i32) {
    %c0_i32 = arith.constant 0 : i32
    %c0_i32_0 = arith.constant 0 : i32
    return %arg0, %c0_i32 : i32, i32
  }
}

</mosaic_0001>

<llo_original>
// kernel: _lambda_.4
$region0: #{_lambda_.4}
  #allocation0 [shape = 'u32[]', space=smem, size = 0x4, offset = 0x4, fixed_abs, tag = 'smem constant byte address 0x4 - core index']
  #allocation1 [shape = 'u32[72,128]{1,0:T(1,128)}', space=vmem, size = 0x9000, scoped, tag = 'internal scratch']
  %s0 = inlined_call_operand.hbm [shape: f32[128,32], index: 0, kind: input, shape index: {}]
  %s1 = inlined_call_operand.hbm [shape: f32[32,8], index: 1, kind: input, shape index: {}]
  %s2 = inlined_call_operand.vmem [shape: f32[128,8], index: 2, kind: output, shape index: {0}]
  %s3 = inlined_call_operand.vmem [shape: f32[1,2,8], index: 3, kind: output, shape index: {1}]
  %4 = xla_tuple %s2, %s3
  %s5 = sld [smem:[#allocation0]]
  $region34: #{_lambda_.4} parent=0
    _
  %s7 = ssub.s32 1, %s5
  %s8 = scalar_select 0, %s7, %s5
  $region1: #{_lambda_.4} parent=0
    #allocation2 [shape = 'u8[65536]{0}', space=vmem, size = 0x10000, scoped, tag = 'input window, operand 0, single buffered']
    #allocation3 [shape = 's32[1]{0}', space=sflag, size = 0x4, scoped, tag = 'scoped memory for _lambda_.4']
    #allocation4 [shape = 'u8[16384]{0}', space=vmem, size = 0x4000, scoped, tag = 'input window, operand 1, single buffered']
    #allocation5 [shape = 's32[1]{0}', space=sflag, size = 0x4, scoped, tag = 'scoped memory for _lambda_.4']
    %9 = vsyncpa [#allocation3], 0
    %10 = vsyncpa [#allocation5], 0
    // Predicated region
    $region2: #{_lambda_.4} parent=1 // pred_check
      _
    $region3: #{_lambda_.4} parent=1 // pred_check_branch
      %12 = sbr.rel (0) target = $region5
    $region4: #{_lambda_.4} parent=1 // pred_region
      %14 = vsyncadd [#allocation3], 0
      %s15 = sshll.u32 %s0, 4
      %s16 = int_to_ptr.hbm [resolvable:$true] %s15
      %s17 = sshll.u32 [#allocation2], 4
      %s18 = int_to_ptr.vmem [resolvable:$true] %s17
      %23 = dma.hbm_to_vmem [thread:$0]  %s16, 2048, %s18, [#allocation3], 128, 128, 8
    $region5: #{_lambda_.4} parent=1 // pred_fallthru
      _
    // Predicated region
    $region6: #{_lambda_.4} parent=1 // pred_check
      _
    $region7: #{_lambda_.4} parent=1 // pred_check_branch
      %25 = sbr.rel (0) target = $region9
    $region8: #{_lambda_.4} parent=1 // pred_region
      %27 = vsyncadd [#allocation5], 0
      %s28 = sshll.u32 %s1, 4
      %s29 = int_to_ptr.hbm [resolvable:$true] %s28
      %s30 = sshll.u32 [#allocation4], 4
      %s31 = int_to_ptr.vmem [resolvable:$true] %s30
      %36 = dma.hbm_to_vmem [thread:$0]  %s29, 512, %s31, [#allocation5], 128, 128, 8
    $region9: #{_lambda_.4} parent=1 // pred_fallthru
      _
    // Predicated region
    $region10: #{_lambda_.4} parent=1 // pred_check
      _
    $region11: #{_lambda_.4} parent=1 // pred_check_branch
      %38 = sbr.rel (0) target = $region13
    $region12: #{_lambda_.4} parent=1 // pred_region
      %40 = dma.done [#allocation3], 2048
    $region13: #{_lambda_.4} parent=1 // pred_fallthru
      _
    // Predicated region
    $region14: #{_lambda_.4} parent=1 // pred_check
      _
    $region15: #{_lambda_.4} parent=1 // pred_check_branch
      %42 = sbr.rel (0) target = $region17
    $region16: #{_lambda_.4} parent=1 // pred_region
      %44 = dma.done [#allocation5], 512
    $region17: #{_lambda_.4} parent=1 // pred_fallthru
      _
    %v45 = vld [vmem:[#allocation2] sm:$0xff]
    %v46 = vld [vmem:[#allocation2 + $0x8] sm:$0xff]
    %v47 = vld [vmem:[#allocation2 + $0x10] sm:$0xff]
    %v48 = vld [vmem:[#allocation2 + $0x18] sm:$0xff]
    %v49 = vld [vmem:[#allocation2 + $0x20] sm:$0xff]
    %v50 = vld [vmem:[#allocation2 + $0x28] sm:$0xff]
    %v51 = vld [vmem:[#allocation2 + $0x30] sm:$0xff]
    %v52 = vld [vmem:[#allocation2 + $0x38] sm:$0xff]
    %v53 = vld [vmem:[#allocation2 + $0x40] sm:$0xff]
    %v54 = vld [vmem:[#allocation2 + $0x48] sm:$0xff]
    %v55 = vld [vmem:[#allocation2 + $0x50] sm:$0xff]
    %v56 = vld [vmem:[#allocation2 + $0x58] sm:$0xff]
    %v57 = vld [vmem:[#allocation2 + $0x60] sm:$0xff]
    %v58 = vld [vmem:[#allocation2 + $0x68] sm:$0xff]
    %v59 = vld [vmem:[#allocation2 + $0x70] sm:$0xff]
    %v60 = vld [vmem:[#allocation2 + $0x78] sm:$0xff]
    %v61 = vld [vmem:[#allocation4] sm:$0xff]
    %v62 = vld [vmem:[#allocation4 + $0x8] sm:$0xff]
    %v63 = vld [vmem:[#allocation4 + $0x10] sm:$0xff]
    %v64 = vld [vmem:[#allocation4 + $0x18] sm:$0xff]
    %vm65 = vcmask 261120
    %v67 = vsel %vm65, %v45, 0
    %v70 = vsel %vm65, %v46, 0
    %v73 = vsel %vm65, %v47, 0
    %v76 = vsel %vm65, %v48, 0
    %v79 = vsel %vm65, %v49, 0
    %v82 = vsel %vm65, %v50, 0
    %v85 = vsel %vm65, %v51, 0
    %v88 = vsel %vm65, %v52, 0
    %v91 = vsel %vm65, %v53, 0
    %v94 = vsel %vm65, %v54, 0
    %v97 = vsel %vm65, %v55, 0
    %v100 = vsel %vm65, %v56, 0
    %v103 = vsel %vm65, %v57, 0
    %v106 = vsel %vm65, %v58, 0
    %v109 = vsel %vm65, %v59, 0
    %v112 = vsel %vm65, %v60, 0
    %114 = vmatpush.msra.mxu0 0.0
    %115 = vmatpush.msra.mxu0 0.0
    %116 = vmatpush.msra.mxu0 0.0
    %117 = vmatpush.msra.mxu0 0.0
    %118 = vmatpush.msra.mxu0 0.0
    %119 = vmatpush.msra.mxu0 0.0
    %120 = vmatpush.msra.mxu0 0.0
    %121 = vmatpush.msra.mxu0 0.0
    %122 = vmatpush.msra.mxu0 0.0
    %123 = vmatpush.msra.mxu0 0.0
    %124 = vmatpush.msra.mxu0 0.0
    %125 = vmatpush.msra.mxu0 0.0
    %126 = vmatpush.msra.mxu0 %v64
    %127 = vmatpush.msra.mxu0 %v63
    %128 = vmatpush.msra.mxu0 %v62
    %129 = vmatpush.msra.mxu0 %v61
    %130 = vmatmul.f32.gmra.mxu0 %v67
    %v131 = vpop.f32.mrf.mxu0
    %v132 = vadd.f32 0.0, %v131
    %133 = vmatmul.f32.gmra.mxu0 %v70
    %v134 = vpop.f32.mrf.mxu0
    %v135 = vadd.f32 0.0, %v134
    %136 = vmatmul.f32.gmra.mxu0 %v73
    %v137 = vpop.f32.mrf.mxu0
    %v138 = vadd.f32 0.0, %v137
    %139 = vmatmul.f32.gmra.mxu0 %v76
    %v140 = vpop.f32.mrf.mxu0
    %v141 = vadd.f32 0.0, %v140
    %142 = vmatmul.f32.gmra.mxu0 %v79
    %v143 = vpop.f32.mrf.mxu0
    %v144 = vadd.f32 0.0, %v143
    %145 = vmatmul.f32.gmra.mxu0 %v82
    %v146 = vpop.f32.mrf.mxu0
    %v147 = vadd.f32 0.0, %v146
    %148 = vmatmul.f32.gmra.mxu0 %v85
    %v149 = vpop.f32.mrf.mxu0
    %v150 = vadd.f32 0.0, %v149
    %151 = vmatmul.f32.gmra.mxu0 %v88
    %v152 = vpop.f32.mrf.mxu0
    %v153 = vadd.f32 0.0, %v152
    %154 = vmatmul.f32.gmra.mxu0 %v91
    %v155 = vpop.f32.mrf.mxu0
    %v156 = vadd.f32 0.0, %v155
    %157 = vmatmul.f32.gmra.mxu0 %v94
    %v158 = vpop.f32.mrf.mxu0
    %v159 = vadd.f32 0.0, %v158
    %160 = vmatmul.f32.gmra.mxu0 %v97
    %v161 = vpop.f32.mrf.mxu0
    %v162 = vadd.f32 0.0, %v161
    %163 = vmatmul.f32.gmra.mxu0 %v100
    %v164 = vpop.f32.mrf.mxu0
    %v165 = vadd.f32 0.0, %v164
    %166 = vmatmul.f32.gmra.mxu0 %v103
    %v167 = vpop.f32.mrf.mxu0
    %v168 = vadd.f32 0.0, %v167
    %169 = vmatmul.f32.gmra.mxu0 %v106
    %v170 = vpop.f32.mrf.mxu0
    %v171 = vadd.f32 0.0, %v170
    %172 = vmatmul.f32.gmra.mxu0 %v109
    %v173 = vpop.f32.mrf.mxu0
    %v174 = vadd.f32 0.0, %v173
    %175 = vmatmul.f32.gmra.mxu0 %v112
    %v176 = vpop.f32.mrf.mxu0
    %v177 = vadd.f32 0.0, %v176
    %178 = vdwg.mxu0
    %vm179 = vcmask 64512
    %180 = vst.msk [vmem:[%s2] sm:$0xff] %vm179, %v132
    %181 = vst.msk [vmem:[%s2 + $0x8] sm:$0xff] %vm179, %v135
    %182 = vst.msk [vmem:[%s2 + $0x10] sm:$0xff] %vm179, %v138
    %183 = vst.msk [vmem:[%s2 + $0x18] sm:$0xff] %vm179, %v141
    %184 = vst.msk [vmem:[%s2 + $0x20] sm:$0xff] %vm179, %v144
    %185 = vst.msk [vmem:[%s2 + $0x28] sm:$0xff] %vm179, %v147
    %186 = vst.msk [vmem:[%s2 + $0x30] sm:$0xff] %vm179, %v150
    %187 = vst.msk [vmem:[%s2 + $0x38] sm:$0xff] %vm179, %v153
    %188 = vst.msk [vmem:[%s2 + $0x40] sm:$0xff] %vm179, %v156
    %189 = vst.msk [vmem:[%s2 + $0x48] sm:$0xff] %vm179, %v159
    %190 = vst.msk [vmem:[%s2 + $0x50] sm:$0xff] %vm179, %v162
    %191 = vst.msk [vmem:[%s2 + $0x58] sm:$0xff] %vm179, %v165
    %192 = vst.msk [vmem:[%s2 + $0x60] sm:$0xff] %vm179, %v168
    %193 = vst.msk [vmem:[%s2 + $0x68] sm:$0xff] %vm179, %v171
    %194 = vst.msk [vmem:[%s2 + $0x70] sm:$0xff] %vm179, %v174
    %195 = vst.msk [vmem:[%s2 + $0x78] sm:$0xff] %vm179, %v177
    %v196 = vsel %vm179, %v132, 0.0
    %v197 = vsel %vm179, %v135, 0.0
    %v198 = vadd.f32 %v196, %v197
    %v199 = vsel %vm179, %v138, 0.0
    %v200 = vadd.f32 %v198, %v199
    %v201 = vsel %vm179, %v141, 0.0
    %v202 = vadd.f32 %v200, %v201
    %v203 = vsel %vm179, %v144, 0.0
    %v204 = vadd.f32 %v202, %v203
    %v205 = vsel %vm179, %v147, 0.0
    %v206 = vadd.f32 %v204, %v205
    %v207 = vsel %vm179, %v150, 0.0
    %v208 = vadd.f32 %v206, %v207
    %v209 = vsel %vm179, %v153, 0.0
    %v210 = vadd.f32 %v208, %v209
    %v211 = vsel %vm179, %v156, 0.0
    %v212 = vadd.f32 %v210, %v211
    %v213 = vsel %vm179, %v159, 0.0
    %v214 = vadd.f32 %v212, %v213
    %v215 = vsel %vm179, %v162, 0.0
    %v216 = vadd.f32 %v214, %v215
    %v217 = vsel %vm179, %v165, 0.0
    %v218 = vadd.f32 %v216, %v217
    %v219 = vsel %vm179, %v168, 0.0
    %v220 = vadd.f32 %v218, %v219
    %v221 = vsel %vm179, %v171, 0.0
    %v222 = vadd.f32 %v220, %v221
    %v223 = vsel %vm179, %v174, 0.0
    %v224 = vadd.f32 %v222, %v223
    %v225 = vsel %vm179, %v177, 0.0
    %v226 = vadd.f32 %v224, %v225
    %v227 = vrot.slane %v226, 4
    %v228 = vadd.f32 %v226, %v227
    %v229 = vrot.slane %v228, 2
    %v230 = vadd.f32 %v228, %v229
    %v231 = vrot.slane %v230, 1
    %v232 = vadd.f32 %v230, %v231
    %v233 = vmul.f32 %v132, %v132
    %v234 = vmul.f32 %v135, %v135
    %v235 = vmul.f32 %v138, %v138
    %v236 = vmul.f32 %v141, %v141
    %v237 = vmul.f32 %v144, %v144
    %v238 = vmul.f32 %v147, %v147
    %v239 = vmul.f32 %v150, %v150
    %v240 = vmul.f32 %v153, %v153
    %v241 = vmul.f32 %v156, %v156
    %v242 = vmul.f32 %v159, %v159
    %v243 = vmul.f32 %v162, %v162
    %v244 = vmul.f32 %v165, %v165
    %v245 = vmul.f32 %v168, %v168
    %v246 = vmul.f32 %v171, %v171
    %v247 = vmul.f32 %v174, %v174
    %v248 = vmul.f32 %v177, %v177
    %v249 = vsel %vm179, %v233, 0.0
    %v250 = vsel %vm179, %v234, 0.0
    %v251 = vadd.f32 %v249, %v250
    %v252 = vsel %vm179, %v235, 0.0
    %v253 = vadd.f32 %v251, %v252
    %v254 = vsel %vm179, %v236, 0.0
    %v255 = vadd.f32 %v253, %v254
    %v256 = vsel %vm179, %v237, 0.0
    %v257 = vadd.f32 %v255, %v256
    %v258 = vsel %vm179, %v238, 0.0
    %v259 = vadd.f32 %v257, %v258
    %v260 = vsel %vm179, %v239, 0.0
    %v261 = vadd.f32 %v259, %v260
    %v262 = vsel %vm179, %v240, 0.0
    %v263 = vadd.f32 %v261, %v262
    %v264 = vsel %vm179, %v241, 0.0
    %v265 = vadd.f32 %v263, %v264
    %v266 = vsel %vm179, %v242, 0.0
    %v267 = vadd.f32 %v265, %v266
    %v268 = vsel %vm179, %v243, 0.0
    %v269 = vadd.f32 %v267, %v268
    %v270 = vsel %vm179, %v244, 0.0
    %v271 = vadd.f32 %v269, %v270
    %v272 = vsel %vm179, %v245, 0.0
    %v273 = vadd.f32 %v271, %v272
    %v274 = vsel %vm179, %v246, 0.0
    %v275 = vadd.f32 %v273, %v274
    %v276 = vsel %vm179, %v247, 0.0
    %v277 = vadd.f32 %v275, %v276
    %v278 = vsel %vm179, %v248, 0.0
    %v279 = vadd.f32 %v277, %v278
    %v280 = vrot.slane %v279, 4
    %v281 = vadd.f32 %v279, %v280
    %v282 = vrot.slane %v281, 2
    %v283 = vadd.f32 %v281, %v282
    %v284 = vrot.slane %v283, 1
    %v285 = vadd.f32 %v283, %v284
    %vm286 = vcmask 1040384
    %v287 = vsel %vm286, %v232, %v285
    %vm288 = vcmask 58368
    %289 = vst.msk [vmem:[%s3] sm:$0x3] %vm288, %v287
    // Predicated region
    $region18: #{_lambda_.4} parent=1 // pred_check
      _
    $region19: #{_lambda_.4} parent=1 // pred_check_branch
      %291 = sbr.rel (0) target = $region21
    $region20: #{_lambda_.4} parent=1 // pred_region
      _
    $region21: #{_lambda_.4} parent=1 // pred_fallthru
      _
    // Predicated region
    $region22: #{_lambda_.4} parent=1 // pred_check
      _
    $region23: #{_lambda_.4} parent=1 // pred_check_branch
      %293 = sbr.rel (0) target = $region25
    $region24: #{_lambda_.4} parent=1 // pred_region
      _
    $region25: #{_lambda_.4} parent=1 // pred_fallthru
      _
    // Predicated region
    $region26: #{_lambda_.4} parent=1 // pred_check
      _
    $region27: #{_lambda_.4} parent=1 // pred_check_branch
      %295 = sbr.rel (0) target = $region29
    $region28: #{_lambda_.4} parent=1 // pred_region
      _
    $region29: #{_lambda_.4} parent=1 // pred_fallthru
      _
    // Predicated region
    $region30: #{_lambda_.4} parent=1 // pred_check
      _
    $region31: #{_lambda_.4} parent=1 // pred_check_branch
      %297 = sbr.rel (0) target = $region33
    $region32: #{_lambda_.4} parent=1 // pred_region
      _
    $region33: #{_lambda_.4} parent=1 // pred_fallthru
      _
    %298 = vsyncpa [#allocation3], 1
    %299 = vsyncpa [#allocation5], 1

// kernel: _lambda_.5
$region0: #{_lambda_.5}
  #allocation0 [shape = 'u32[]', space=smem, size = 0x4, offset = 0x4, fixed_abs, tag = 'smem constant byte address 0x4 - core index']
  #allocation1 [shape = 'u32[72,128]{1,0:T(1,128)}', space=vmem, size = 0x9000, scoped, tag = 'internal scratch']
  #allocation2 [shape = 'f32[10,10,8]{2,1,0:T(8,128)}', space=vmem, size = 0x14000, scoped, tag = 'scratch operand']
  %s0 = inlined_call_operand.vmem [shape: f32[2,8,8,8], index: 0, kind: input, shape index: {}]
  %s1 = inlined_call_operand.hbm [shape: f32[72,32], index: 1, kind: input, shape index: {}]
  %s2 = inlined_call_operand.vmem [shape: f32[1,8], index: 2, kind: input, shape index: {}]
  %s3 = inlined_call_operand.vmem [shape: f32[1,8], index: 3, kind: input, shape index: {}]
  %s4 = inlined_call_operand.vmem [shape: f32[2,64,32], index: 4, kind: output, shape index: {0}]
  %s5 = inlined_call_operand.vmem [shape: f32[2,2,32], index: 5, kind: output, shape index: {1}]
  %6 = xla_tuple %s4, %s5
  %s7 = sld [smem:[#allocation0]]
  $region61: #{_lambda_.5} parent=0
    _
  %s9 = ssub.s32 1, %s7
  %s10 = scalar_select 0, %s9, %s7
  $region1: #{_lambda_.5} parent=0
    #allocation3 [shape = 'u8[36864]{0}', space=vmem, size = 0x9000, scoped, tag = 'input window, operand 1, single buffered']
    #allocation4 [shape = 's32[2]{0}', space=sflag, size = 0x8, scoped, tag = 'scoped memory for _lambda_.5']
    %11 = vsyncpa [#allocation4], 0
    loop: start=0, step=1, limit=4
    $region2: #{_lambda_.5} parent=1 // loop_pre_header
      _
    $region3: #{_lambda_.5} parent=1 // loop_header
      %s13 = sphi 0, %s17
      %p14 = scmp.ge.s32.totalorder %s13, 4
      %s23 = sphi 0, %s25
      %s26 = sphi 0, %s23
      %s27 = sphi 0, %s26
      %s43 = sphi 0, %s27
      %s47 = sphi 0, %s47
      %s49 = sphi 0, %s47
      %s50 = sphi 0, %s49
      %s64 = sphi 0, %s50
      %s68 = sphi 0, %s68
      %s70 = sphi 0, %s68
      %s71 = sphi 0, %s70
      %s85 = sphi 0, %s71
      %s89 = sphi 0, %s89
      %s91 = sphi 0, %s89
      %s92 = sphi 0, %s91
      %s106 = sphi 0, %s92
      %s112 = sphi 0, %s114
      %s115 = sphi 0, %s112
      %s116 = sphi 0, %s115
      %s132 = sphi 0, %s116
      %s138 = sphi 0, %s140
      %s141 = sphi 0, %s138
      %s142 = sphi 0, %s141
      %s158 = sphi 0, %s142
    $region4: #{_lambda_.5} parent=1 // loop_header_branch
      %16 = sbr.rel (%p14) target = $region8
    $region5: #{_lambda_.5} parent=1 // loop_body
      %s18 = ssub.s32 %s13, 1
      %s19 = ssub.s32 %s13, 2
      %s20 = sadd.s32 %s13, 1
      %s21 = ssub.s32 %s13, %s20
      %p22 = scmp.eq.s32.totalorder %s21, 0
      %s24 = sadd.s32 %s23, 1
      %s25 = scalar_select %p22, %s23, %s24
      %p28 = pneg %p22
      %p29 = scmp.eq.s32.totalorder %s13, 1
      %p30 = por %p28, %p29
      %p31 = scmp.ne.s32.totalorder %s23, %s26
      %p32 = scmp.eq.s32.totalorder %s13, 0
      %p33 = por %p31, %p32
      %p34 = scmp.ne.s32.totalorder %s23, %s26
      %p35 = scmp.eq.s32.totalorder %s18, 1
      %p36 = por %p34, %p35
      %p37 = scmp.ne.s32.totalorder %s26, %s27
      %p38 = scmp.eq.s32.totalorder %s18, 0
      %p39 = por %p37, %p38
      %p40 = scmp.ne.s32.totalorder %s26, %s27
      %p41 = scmp.eq.s32.totalorder %s19, 1
      %p42 = por %p40, %p41
      %p44 = scmp.ne.s32.totalorder %s27, %s43
      %p45 = scmp.eq.s32.totalorder %s19, 0
      %p46 = por %p44, %p45
      %s48 = sadd.s32 %s47, 1
      %p51 = scmp.eq.s32.totalorder %s13, 1
      %p52 = scmp.ne.s32.totalorder %s47, %s49
      %p53 = scmp.eq.s32.totalorder %s13, 0
      %p54 = por %p52, %p53
      %p55 = scmp.ne.s32.totalorder %s47, %s49
      %p56 = scmp.eq.s32.totalorder %s18, 1
      %p57 = por %p55, %p56
      %p58 = scmp.ne.s32.totalorder %s49, %s50
      %p59 = scmp.eq.s32.totalorder %s18, 0
      %p60 = por %p58, %p59
      %p61 = scmp.ne.s32.totalorder %s49, %s50
      %p62 = scmp.eq.s32.totalorder %s19, 1
      %p63 = por %p61, %p62
      %p65 = scmp.ne.s32.totalorder %s50, %s64
      %p66 = scmp.eq.s32.totalorder %s19, 0
      %p67 = por %p65, %p66
      %s69 = sadd.s32 %s68, 1
      %p72 = scmp.eq.s32.totalorder %s13, 1
      %p73 = scmp.ne.s32.totalorder %s68, %s70
      %p74 = scmp.eq.s32.totalorder %s13, 0
      %p75 = por %p73, %p74
      %p76 = scmp.ne.s32.totalorder %s68, %s70
      %p77 = scmp.eq.s32.totalorder %s18, 1
      %p78 = por %p76, %p77
      %p79 = scmp.ne.s32.totalorder %s70, %s71
      %p80 = scmp.eq.s32.totalorder %s18, 0
      %p81 = por %p79, %p80
      %p82 = scmp.ne.s32.totalorder %s70, %s71
      %p83 = scmp.eq.s32.totalorder %s19, 1
      %p84 = por %p82, %p83
      %p86 = scmp.ne.s32.totalorder %s71, %s85
      %p87 = scmp.eq.s32.totalorder %s19, 0
      %p88 = por %p86, %p87
      %s90 = sadd.s32 %s89, 1
      %p93 = scmp.eq.s32.totalorder %s13, 1
      %p94 = scmp.ne.s32.totalorder %s89, %s91
      %p95 = scmp.eq.s32.totalorder %s13, 0
      %p96 = por %p94, %p95
      %p97 = scmp.ne.s32.totalorder %s89, %s91
      %p98 = scmp.eq.s32.totalorder %s18, 1
      %p99 = por %p97, %p98
      %p100 = scmp.ne.s32.totalorder %s91, %s92
      %p101 = scmp.eq.s32.totalorder %s18, 0
      %p102 = por %p100, %p101
      %p103 = scmp.ne.s32.totalorder %s91, %s92
      %p104 = scmp.eq.s32.totalorder %s19, 1
      %p105 = por %p103, %p104
      %p107 = scmp.ne.s32.totalorder %s92, %s106
      %p108 = scmp.eq.s32.totalorder %s19, 0
      %p109 = por %p107, %p108
      %s110 = ssub.s32 %s13, %s20
      %p111 = scmp.eq.s32.totalorder %s110, 0
      %s113 = sadd.s32 %s112, 1
      %s114 = scalar_select %p111, %s112, %s113
      %p117 = pneg %p111
      %p118 = scmp.eq.s32.totalorder %s13, 1
      %p119 = por %p117, %p118
      %p120 = scmp.ne.s32.totalorder %s112, %s115
      %p121 = scmp.eq.s32.totalorder %s13, 0
      %p122 = por %p120, %p121
      %p123 = scmp.ne.s32.totalorder %s112, %s115
      %p124 = scmp.eq.s32.totalorder %s18, 1
      %p125 = por %p123, %p124
      %p126 = scmp.ne.s32.totalorder %s115, %s116
      %p127 = scmp.eq.s32.totalorder %s18, 0
      %p128 = por %p126, %p127
      %p129 = scmp.ne.s32.totalorder %s115, %s116
      %p130 = scmp.eq.s32.totalorder %s19, 1
      %p131 = por %p129, %p130
      %p133 = scmp.ne.s32.totalorder %s116, %s132
      %p134 = scmp.eq.s32.totalorder %s19, 0
      %p135 = por %p133, %p134
      %s136 = ssub.s32 %s13, %s20
      %p137 = scmp.eq.s32.totalorder %s136, 0
      %s139 = sadd.s32 %s138, 1
      %s140 = scalar_select %p137, %s138, %s139
      %p143 = pneg %p137
      %p144 = scmp.eq.s32.totalorder %s13, 1
      %p145 = por %p143, %p144
      %p146 = scmp.ne.s32.totalorder %s138, %s141
      %p147 = scmp.eq.s32.totalorder %s13, 0
      %p148 = por %p146, %p147
      %p149 = scmp.ne.s32.totalorder %s138, %s141
      %p150 = scmp.eq.s32.totalorder %s18, 1
      %p151 = por %p149, %p150
      %p152 = scmp.ne.s32.totalorder %s141, %s142
      %p153 = scmp.eq.s32.totalorder %s18, 0
      %p154 = por %p152, %p153
      %p155 = scmp.ne.s32.totalorder %s141, %s142
      %p156 = scmp.eq.s32.totalorder %s19, 1
      %p157 = por %p155, %p156
      %p159 = scmp.ne.s32.totalorder %s142, %s158
      %p160 = scmp.eq.s32.totalorder %s19, 0
      %p161 = por %p159, %p160
      %p162 = scmp.le.s32.totalorder 1, %s13
      %p163 = scmp.lt.s32.totalorder %s13, 3
      %p164 = pnand %p162, %p163
      %p165 = pneg %p164
      // Predicated region
      $region9: #{_lambda_.5} parent=5 // pred_check
        _
      $region10: #{_lambda_.5} parent=5 // pred_check_branch
        %167 = sbr.rel (%p164) target = $region12
      $region11: #{_lambda_.5} parent=5 // pred_region
        %s168 = ssub.s32 %s13, 1
        // Predicated region
        $region13: #{_lambda_.5} parent=11 // pred_check
          %p169 = pneg %p60
        $region14: #{_lambda_.5} parent=11 // pred_check_branch
          %171 = sbr.rel (%p169) target = $region16
        $region15: #{_lambda_.5} parent=11 // pred_region
          %173 = vsyncadd [#allocation4], 0
          %s174 = sshll.u32 %s1, 4
          %s175 = int_to_ptr.hbm [resolvable:$true] %s174
          %s176 = sshll.u32 [#allocation3], 4
          %s177 = int_to_ptr.vmem [resolvable:$true] %s176
          %182 = dma.hbm_to_vmem [thread:$0]  %s175, 1152, %s177, [#allocation4], 128, 128, 8
        $region16: #{_lambda_.5} parent=11 // pred_fallthru
          _
        // Predicated region
        $region17: #{_lambda_.5} parent=11 // pred_check
          %p183 = pneg %p81
        $region18: #{_lambda_.5} parent=11 // pred_check_branch
          %185 = sbr.rel (%p183) target = $region20
        $region19: #{_lambda_.5} parent=11 // pred_region
          _
        $region20: #{_lambda_.5} parent=11 // pred_fallthru
          _
        // Predicated region
        $region21: #{_lambda_.5} parent=11 // pred_check
          %p186 = pneg %p102
        $region22: #{_lambda_.5} parent=11 // pred_check_branch
          %188 = sbr.rel (%p186) target = $region24
        $region23: #{_lambda_.5} parent=11 // pred_region
          _
        $region24: #{_lambda_.5} parent=11 // pred_fallthru
          _
      $region12: #{_lambda_.5} parent=5 // pred_fallthru
        _
      %p189 = scmp.lt.s32.totalorder %s13, 2
      // Predicated region
      $region25: #{_lambda_.5} parent=5 // pred_check
        %p190 = pneg %p189
      $region26: #{_lambda_.5} parent=5 // pred_check_branch
        %192 = sbr.rel (%p190) target = $region28
      $region27: #{_lambda_.5} parent=5 // pred_region
        // Predicated region
        $region29: #{_lambda_.5} parent=27 // pred_check
          %p193 = pneg %p33
        $region30: #{_lambda_.5} parent=27 // pred_check_branch
          %195 = sbr.rel (%p193) target = $region32
        $region31: #{_lambda_.5} parent=27 // pred_region
          %p196 = scmp.lt.s32.totalorder %s13, 1
          %s197 = scalar_select %p196, %s13, 1
          %s198 = smul.addr %s197, 8
          %s199 = smul.addr %s198, 8
          %s200 = scalar_lea.vmem %s0, %s199
        $region32: #{_lambda_.5} parent=27 // pred_fallthru
          _
      $region28: #{_lambda_.5} parent=5 // pred_fallthru
        _
      %p201 = scmp.le.s32.totalorder 1, %s13
      %p202 = scmp.lt.s32.totalorder %s13, 3
      %p203 = pnand %p201, %p202
      %p204 = pneg %p203
      // Predicated region
      $region33: #{_lambda_.5} parent=5 // pred_check
        _
      $region34: #{_lambda_.5} parent=5 // pred_check_branch
        %206 = sbr.rel (%p203) target = $region36
      $region35: #{_lambda_.5} parent=5 // pred_region
        %s207 = ssub.s32 %s13, 1
        // Predicated region
        $region37: #{_lambda_.5} parent=35 // pred_check
          %p208 = pneg %p60
        $region38: #{_lambda_.5} parent=35 // pred_check_branch
          %210 = sbr.rel (%p208) target = $region40
        $region39: #{_lambda_.5} parent=35 // pred_region
          %212 = dma.done [#allocation4], 1152
        $region40: #{_lambda_.5} parent=35 // pred_fallthru
          _
        %p213 = scmp.lt.s32.totalorder %s18, 1
        %s214 = scalar_select %p213, %s18, 1
        %s215 = smul.addr %s214, 8
        %s216 = smul.addr %s215, 8
        %s217 = scalar_lea.vmem %s0, %s216
        %p218 = pneg %p39
        %p219 = pneg %p36
        %p220 = pneg %p60
        %p221 = pneg %p57
        %p222 = pneg %p81
        %p223 = pneg %p78
        %p224 = pneg %p102
        %p225 = pneg %p99
        %p226 = pneg %p128
        %p227 = pneg %p125
        %p228 = scmp.lt.s32.totalorder %s18, 1
        %s229 = scalar_select %p228, %s18, 1
        %s230 = smul.addr %s229, 8
        %s231 = smul.addr %s230, 8
        %s232 = scalar_lea.vmem %s4, %s231
        %p233 = pneg %p154
        %p234 = pneg %p151
        %p235 = scmp.lt.s32.totalorder %s18, 1
        %s236 = scalar_select %p235, %s18, 1
        %s237 = smul.addr %s236, 2
        %s238 = scalar_lea.vmem %s5, %s237
        %p239 = scmp.lt.s32.totalorder %s18, 1
        %s240 = scalar_select %p239, %s18, 1
        %s241 = smul.addr %s240, 8
        %s242 = smul.addr %s241, 8
        %s243 = scalar_lea.vmem %s0, %s242
        %p244 = scmp.lt.s32.totalorder %s18, 1
        %s245 = scalar_select %p244, %s18, 1
        %s246 = smul.addr %s245, 8
        %s247 = smul.addr %s246, 8
        %s248 = scalar_lea.vmem %s4, %s247
        %p249 = scmp.lt.s32.totalorder %s18, 1
        %s250 = scalar_select %p249, %s18, 1
        %s251 = smul.addr %s250, 2
        %s252 = scalar_lea.vmem %s5, %s251
        %vm253 = vcmask 64512
        %254 = vst.msk [vmem:[#allocation2] sm:$0xff] %vm253, 0.0
        %vm255 = vcmask 58368
        %256 = vst.msk [vmem:[#allocation2 + $0x8] sm:$0x3] %vm255, 0.0
        %s257 = scalar_lea.vmem [#allocation2], 144
        %258 = vst.msk [vmem:[%s257] sm:$0xff] %vm253, 0.0
        %259 = vst.msk [vmem:[%s257 + $0x8] sm:$0x3] %vm255, 0.0
        %vm260 = vcmask 57344
        %261 = vst.msk [vmem:[#allocation2] sm:$0x1] %vm260, 0.0
        %262 = vst.msk [vmem:[#allocation2 + $0x10] sm:$0x1] %vm260, 0.0
        %263 = vst.msk [vmem:[#allocation2 + $0x20] sm:$0x1] %vm260, 0.0
        %264 = vst.msk [vmem:[#allocation2 + $0x30] sm:$0x1] %vm260, 0.0
        %265 = vst.msk [vmem:[#allocation2 + $0x40] sm:$0x1] %vm260, 0.0
        %266 = vst.msk [vmem:[#allocation2 + $0x50] sm:$0x1] %vm260, 0.0
        %267 = vst.msk [vmem:[#allocation2 + $0x60] sm:$0x1] %vm260, 0.0
        %268 = vst.msk [vmem:[#allocation2 + $0x70] sm:$0x1] %vm260, 0.0
        %269 = vst.msk [vmem:[#allocation2 + $0x80] sm:$0x1] %vm260, 0.0
        %270 = vst.msk [vmem:[#allocation2 + $0x90] sm:$0x1] %vm260, 0.0
        %271 = vst.msk [vmem:[#allocation2 + $0x9] sm:$0x1] %vm260, 0.0
        %272 = vst.msk [vmem:[#allocation2 + $0x19] sm:$0x1] %vm260, 0.0
        %273 = vst.msk [vmem:[#allocation2 + $0x29] sm:$0x1] %vm260, 0.0
        %274 = vst.msk [vmem:[#allocation2 + $0x39] sm:$0x1] %vm260, 0.0
        %275 = vst.msk [vmem:[#allocation2 + $0x49] sm:$0x1] %vm260, 0.0
        %276 = vst.msk [vmem:[#allocation2 + $0x59] sm:$0x1] %vm260, 0.0
        %277 = vst.msk [vmem:[#allocation2 + $0x69] sm:$0x1] %vm260, 0.0
        %278 = vst.msk [vmem:[#allocation2 + $0x79] sm:$0x1] %vm260, 0.0
        %279 = vst.msk [vmem:[#allocation2 + $0x89] sm:$0x1] %vm260, 0.0
        %280 = vst.msk [vmem:[#allocation2 + $0x99] sm:$0x1] %vm260, 0.0
        %v281 = vld [vmem:[%s243] sm:$0xff]
        %v282 = vld [vmem:[%s243 + $0x8] sm:$0xff]
        %v283 = vld [vmem:[%s243 + $0x10] sm:$0xff]
        %v284 = vld [vmem:[%s243 + $0x18] sm:$0xff]
        %v285 = vld [vmem:[%s243 + $0x20] sm:$0xff]
        %v286 = vld [vmem:[%s243 + $0x28] sm:$0xff]
        %v287 = vld [vmem:[%s243 + $0x30] sm:$0xff]
        %v288 = vld [vmem:[%s243 + $0x38] sm:$0xff]
        %v289 = vld [vmem:[%s2] sm:$0x1]
        %v291 = vperm.slane %v289, 0
        %v293 = vmul.f32 %v281, %v291
        %v294 = vmul.f32 %v282, %v291
        %v295 = vmul.f32 %v283, %v291
        %v296 = vmul.f32 %v284, %v291
        %v297 = vmul.f32 %v285, %v291
        %v298 = vmul.f32 %v286, %v291
        %v299 = vmul.f32 %v287, %v291
        %v300 = vmul.f32 %v288, %v291
        %v301 = vld [vmem:[%s3] sm:$0x1]
        %v303 = vperm.slane %v301, 0
        %v305 = vadd.f32 %v293, %v303
        %v306 = vadd.f32 %v294, %v303
        %v307 = vadd.f32 %v295, %v303
        %v308 = vadd.f32 %v296, %v303
        %v309 = vadd.f32 %v297, %v303
        %v310 = vadd.f32 %v298, %v303
        %v311 = vadd.f32 %v299, %v303
        %v312 = vadd.f32 %v300, %v303
        %v313 = vmax.f32 %v305, 0.0
        %v314 = vmax.f32 %v306, 0.0
        %v315 = vmax.f32 %v307, 0.0
        %v316 = vmax.f32 %v308, 0.0
        %v317 = vmax.f32 %v309, 0.0
        %v318 = vmax.f32 %v310, 0.0
        %v319 = vmax.f32 %v311, 0.0
        %v320 = vmax.f32 %v312, 0.0
        %s321 = scalar_lea.vmem [#allocation2], 16
        %322 = vst.msk [vmem:[%s321 + $0x1] sm:$0xff] %vm253, %v313
        %323 = vst.msk [vmem:[%s321 + $0x11] sm:$0xff] %vm253, %v314
        %324 = vst.msk [vmem:[%s321 + $0x21] sm:$0xff] %vm253, %v315
        %325 = vst.msk [vmem:[%s321 + $0x31] sm:$0xff] %vm253, %v316
        %326 = vst.msk [vmem:[%s321 + $0x41] sm:$0xff] %vm253, %v317
        %327 = vst.msk [vmem:[%s321 + $0x51] sm:$0xff] %vm253, %v318
        %328 = vst.msk [vmem:[%s321 + $0x61] sm:$0xff] %vm253, %v319
        %329 = vst.msk [vmem:[%s321 + $0x71] sm:$0xff] %vm253, %v320
        %v330 = vld [vmem:[#allocation2] sm:$0xff]
        %v331 = vld [vmem:[#allocation2 + $0x8] sm:$0x3]
        %v332 = vld [vmem:[#allocation2 + $0x10] sm:$0xff]
        %v333 = vld [vmem:[#allocation2 + $0x18] sm:$0x3]
        %v334 = vld [vmem:[#allocation2 + $0x20] sm:$0xff]
        %v335 = vld [vmem:[#allocation2 + $0x28] sm:$0x3]
        %v336 = vld [vmem:[#allocation2 + $0x30] sm:$0xff]
        %v337 = vld [vmem:[#allocation2 + $0x38] sm:$0x3]
        %v338 = vld [vmem:[#allocation2 + $0x40] sm:$0xff]
        %v339 = vld [vmem:[#allocation2 + $0x48] sm:$0x3]
        %v340 = vld [vmem:[#allocation2 + $0x50] sm:$0xff]
        %v341 = vld [vmem:[#allocation2 + $0x58] sm:$0x3]
        %v342 = vld [vmem:[#allocation2 + $0x60] sm:$0xff]
        %v343 = vld [vmem:[#allocation2 + $0x68] sm:$0x3]
        %v344 = vld [vmem:[#allocation2 + $0x70] sm:$0xff]
        %v345 = vld [vmem:[#allocation2 + $0x78] sm:$0x3]
        %v346 = vld [vmem:[#allocation2 + $0x80] sm:$0xff]
        %v347 = vld [vmem:[#allocation2 + $0x88] sm:$0x3]
        %v348 = vld [vmem:[#allocation2 + $0x90] sm:$0xff]
        %v349 = vld [vmem:[#allocation2 + $0x98] sm:$0x3]
        %vm366 = vcmask 1046528
        %v367 = vrot.slane %v330, 1
        %v368 = vrot.slane %v331, 1
        %v369 = vsel %vm366, %v367, %v368
        %v370 = vrot.slane %v332, 1
        %v371 = vrot.slane %v333, 1
        %v372 = vsel %vm366, %v370, %v371
        %v373 = vrot.slane %v334, 1
        %v374 = vrot.slane %v335, 1
        %v375 = vsel %vm366, %v373, %v374
        %v376 = vrot.slane %v336, 1
        %v377 = vrot.slane %v337, 1
        %v378 = vsel %vm366, %v376, %v377
        %v379 = vrot.slane %v338, 1
        %v380 = vrot.slane %v339, 1
        %v381 = vsel %vm366, %v379, %v380
        %v382 = vrot.slane %v340, 1
        %v383 = vrot.slane %v341, 1
        %v384 = vsel %vm366, %v382, %v383
        %v385 = vrot.slane %v342, 1
        %v386 = vrot.slane %v343, 1
        %v387 = vsel %vm366, %v385, %v386
        %v388 = vrot.slane %v344, 1
        %v389 = vrot.slane %v345, 1
        %v390 = vsel %vm366, %v388, %v389
        %vm391 = vcmask 1045504
        %v392 = vrot.slane %v330, 2
        %v393 = vrot.slane %v331, 2
        %v394 = vsel %vm391, %v392, %v393
        %v395 = vrot.slane %v332, 2
        %v396 = vrot.slane %v333, 2
        %v397 = vsel %vm391, %v395, %v396
        %v398 = vrot.slane %v334, 2
        %v399 = vrot.slane %v335, 2
        %v400 = vsel %vm391, %v398, %v399
        %v401 = vrot.slane %v336, 2
        %v402 = vrot.slane %v337, 2
        %v403 = vsel %vm391, %v401, %v402
        %v404 = vrot.slane %v338, 2
        %v405 = vrot.slane %v339, 2
        %v406 = vsel %vm391, %v404, %v405
        %v407 = vrot.slane %v340, 2
        %v408 = vrot.slane %v341, 2
        %v409 = vsel %vm391, %v407, %v408
        %v410 = vrot.slane %v342, 2
        %v411 = vrot.slane %v343, 2
        %v412 = vsel %vm391, %v410, %v411
        %v413 = vrot.slane %v344, 2
        %v414 = vrot.slane %v345, 2
        %v415 = vsel %vm391, %v413, %v414
        %v418 = vrot.slane %v346, 1
        %v419 = vrot.slane %v347, 1
        %v420 = vsel %vm366, %v418, %v419
        %v421 = vrot.slane %v346, 2
        %v422 = vrot.slane %v347, 2
        %v423 = vsel %vm391, %v421, %v422
        %v426 = vrot.slane %v348, 1
        %v427 = vrot.slane %v349, 1
        %v428 = vsel %vm366, %v426, %v427
        %v429 = vrot.slane %v348, 2
        %v430 = vrot.slane %v349, 2
        %v431 = vsel %vm391, %v429, %v430
        %432 = vrot.lane.b32.xlu0 %v369, 8
        %v433 = vpop.permute.xlu0 %432
        %434 = vrot.lane.b32.xlu0 %v372, 8
        %v435 = vpop.permute.xlu0 %434
        %436 = vrot.lane.b32.xlu0 %v375, 8
        %v437 = vpop.permute.xlu0 %436
        %438 = vrot.lane.b32.xlu0 %v378, 8
        %v439 = vpop.permute.xlu0 %438
        %440 = vrot.lane.b32.xlu0 %v381, 8
        %v441 = vpop.permute.xlu0 %440
        %442 = vrot.lane.b32.xlu0 %v384, 8
        %v443 = vpop.permute.xlu0 %442
        %444 = vrot.lane.b32.xlu0 %v387, 8
        %v445 = vpop.permute.xlu0 %444
        %446 = vrot.lane.b32.xlu0 %v390, 8
        %v447 = vpop.permute.xlu0 %446
        %456 = vrot.lane.b32.xlu0 %v394, 16
        %v457 = vpop.permute.xlu0 %456
        %458 = vrot.lane.b32.xlu0 %v397, 16
        %v459 = vpop.permute.xlu0 %458
        %460 = vrot.lane.b32.xlu0 %v400, 16
        %v461 = vpop.permute.xlu0 %460
        %462 = vrot.lane.b32.xlu0 %v403, 16
        %v463 = vpop.permute.xlu0 %462
        %464 = vrot.lane.b32.xlu0 %v406, 16
        %v465 = vpop.permute.xlu0 %464
        %466 = vrot.lane.b32.xlu0 %v409, 16
        %v467 = vpop.permute.xlu0 %466
        %468 = vrot.lane.b32.xlu0 %v412, 16
        %v469 = vpop.permute.xlu0 %468
        %470 = vrot.lane.b32.xlu0 %v415, 16
        %v471 = vpop.permute.xlu0 %470
        %480 = vrot.lane.b32.xlu0 %v332, 24
        %v481 = vpop.permute.xlu0 %480
        %482 = vrot.lane.b32.xlu0 %v334, 24
        %v483 = vpop.permute.xlu0 %482
        %484 = vrot.lane.b32.xlu0 %v336, 24
        %v485 = vpop.permute.xlu0 %484
        %486 = vrot.lane.b32.xlu0 %v338, 24
        %v487 = vpop.permute.xlu0 %486
        %488 = vrot.lane.b32.xlu0 %v340, 24
        %v489 = vpop.permute.xlu0 %488
        %490 = vrot.lane.b32.xlu0 %v342, 24
        %v491 = vpop.permute.xlu0 %490
        %492 = vrot.lane.b32.xlu0 %v344, 24
        %v493 = vpop.permute.xlu0 %492
        %494 = vrot.lane.b32.xlu0 %v346, 24
        %v495 = vpop.permute.xlu0 %494
        %504 = vrot.lane.b32.xlu0 %v372, 32
        %v505 = vpop.permute.xlu0 %504
        %506 = vrot.lane.b32.xlu0 %v375, 32
        %v507 = vpop.permute.xlu0 %506
        %508 = vrot.lane.b32.xlu0 %v378, 32
        %v509 = vpop.permute.xlu0 %508
        %510 = vrot.lane.b32.xlu0 %v381, 32
        %v511 = vpop.permute.xlu0 %510
        %512 = vrot.lane.b32.xlu0 %v384, 32
        %v513 = vpop.permute.xlu0 %512
        %514 = vrot.lane.b32.xlu0 %v387, 32
        %v515 = vpop.permute.xlu0 %514
        %516 = vrot.lane.b32.xlu0 %v390, 32
        %v517 = vpop.permute.xlu0 %516
        %518 = vrot.lane.b32.xlu0 %v420, 32
        %v519 = vpop.permute.xlu0 %518
        %528 = vrot.lane.b32.xlu0 %v397, 40
        %v529 = vpop.permute.xlu0 %528
        %530 = vrot.lane.b32.xlu0 %v400, 40
        %v531 = vpop.permute.xlu0 %530
        %532 = vrot.lane.b32.xlu0 %v403, 40
        %v533 = vpop.permute.xlu0 %532
        %534 = vrot.lane.b32.xlu0 %v406, 40
        %v535 = vpop.permute.xlu0 %534
        %536 = vrot.lane.b32.xlu0 %v409, 40
        %v537 = vpop.permute.xlu0 %536
        %538 = vrot.lane.b32.xlu0 %v412, 40
        %v539 = vpop.permute.xlu0 %538
        %540 = vrot.lane.b32.xlu0 %v415, 40
        %v541 = vpop.permute.xlu0 %540
        %542 = vrot.lane.b32.xlu0 %v423, 40
        %v543 = vpop.permute.xlu0 %542
        %552 = vrot.lane.b32.xlu0 %v334, 48
        %v553 = vpop.permute.xlu0 %552
        %554 = vrot.lane.b32.xlu0 %v336, 48
        %v555 = vpop.permute.xlu0 %554
        %556 = vrot.lane.b32.xlu0 %v338, 48
        %v557 = vpop.permute.xlu0 %556
        %558 = vrot.lane.b32.xlu0 %v340, 48
        %v559 = vpop.permute.xlu0 %558
        %560 = vrot.lane.b32.xlu0 %v342, 48
        %v561 = vpop.permute.xlu0 %560
        %562 = vrot.lane.b32.xlu0 %v344, 48
        %v563 = vpop.permute.xlu0 %562
        %564 = vrot.lane.b32.xlu0 %v346, 48
        %v565 = vpop.permute.xlu0 %564
        %566 = vrot.lane.b32.xlu0 %v348, 48
        %v567 = vpop.permute.xlu0 %566
        %576 = vrot.lane.b32.xlu0 %v375, 56
        %v577 = vpop.permute.xlu0 %576
        %578 = vrot.lane.b32.xlu0 %v378, 56
        %v579 = vpop.permute.xlu0 %578
        %580 = vrot.lane.b32.xlu0 %v381, 56
        %v581 = vpop.permute.xlu0 %580
        %582 = vrot.lane.b32.xlu0 %v384, 56
        %v583 = vpop.permute.xlu0 %582
        %584 = vrot.lane.b32.xlu0 %v387, 56
        %v585 = vpop.permute.xlu0 %584
        %586 = vrot.lane.b32.xlu0 %v390, 56
        %v587 = vpop.permute.xlu0 %586
        %588 = vrot.lane.b32.xlu0 %v420, 56
        %v589 = vpop.permute.xlu0 %588
        %590 = vrot.lane.b32.xlu0 %v428, 56
        %v591 = vpop.permute.xlu0 %590
        %600 = vrot.lane.b32.xlu0 %v400, 64
        %v601 = vpop.permute.xlu0 %600
        %602 = vrot.lane.b32.xlu0 %v403, 64
        %v603 = vpop.permute.xlu0 %602
        %604 = vrot.lane.b32.xlu0 %v406, 64
        %v605 = vpop.permute.xlu0 %604
        %606 = vrot.lane.b32.xlu0 %v409, 64
        %v607 = vpop.permute.xlu0 %606
        %608 = vrot.lane.b32.xlu0 %v412, 64
        %v609 = vpop.permute.xlu0 %608
        %610 = vrot.lane.b32.xlu0 %v415, 64
        %v611 = vpop.permute.xlu0 %610
        %612 = vrot.lane.b32.xlu0 %v423, 64
        %v613 = vpop.permute.xlu0 %612
        %614 = vrot.lane.b32.xlu0 %v431, 64
        %v615 = vpop.permute.xlu0 %614
        %v624 = vsel %vm253, %v330, %v433
        %v625 = vsel %vm253, %v332, %v435
        %v626 = vsel %vm253, %v334, %v437
        %v627 = vsel %vm253, %v336, %v439
        %v628 = vsel %vm253, %v338, %v441
        %v629 = vsel %vm253, %v340, %v443
        %v630 = vsel %vm253, %v342, %v445
        %v631 = vsel %vm253, %v344, %v447
        %vm632 = vcmask 130048
        %v633 = vsel %vm632, %v624, %v457
        %v634 = vsel %vm632, %v625, %v459
        %v635 = vsel %vm632, %v626, %v461
        %v636 = vsel %vm632, %v627, %v463
        %v637 = vsel %vm632, %v628, %v465
        %v638 = vsel %vm632, %v629, %v467
        %v639 = vsel %vm632, %v630, %v469
        %v640 = vsel %vm632, %v631, %v471
        %vm641 = vcmask 195584
        %v642 = vsel %vm641, %v633, %v481
        %v643 = vsel %vm641, %v634, %v483
        %v644 = vsel %vm641, %v635, %v485
        %v645 = vsel %vm641, %v636, %v487
        %v646 = vsel %vm641, %v637, %v489
        %v647 = vsel %vm641, %v638, %v491
        %v648 = vsel %vm641, %v639, %v493
        %v649 = vsel %vm641, %v640, %v495
        %vm650 = vcmask 261120
        %v651 = vsel %vm650, %v642, %v505
        %v652 = vsel %vm650, %v643, %v507
        %v653 = vsel %vm650, %v644, %v509
        %v654 = vsel %vm650, %v645, %v511
        %v655 = vsel %vm650, %v646, %v513
        %v656 = vsel %vm650, %v647, %v515
        %v657 = vsel %vm650, %v648, %v517
        %v658 = vsel %vm650, %v649, %v519
        %vm659 = vcmask 326656
        %v660 = vsel %vm659, %v651, %v529
        %v661 = vsel %vm659, %v652, %v531
        %v662 = vsel %vm659, %v653, %v533
        %v663 = vsel %vm659, %v654, %v535
        %v664 = vsel %vm659, %v655, %v537
        %v665 = vsel %vm659, %v656, %v539
        %v666 = vsel %vm659, %v657, %v541
        %v667 = vsel %vm659, %v658, %v543
        %vm668 = vcmask 392192
        %v669 = vsel %vm668, %v660, %v553
        %v670 = vsel %vm668, %v661, %v555
        %v671 = vsel %vm668, %v662, %v557
        %v672 = vsel %vm668, %v663, %v559
        %v673 = vsel %vm668, %v664, %v561
        %v674 = vsel %vm668, %v665, %v563
        %v675 = vsel %vm668, %v666, %v565
        %v676 = vsel %vm668, %v667, %v567
        %vm677 = vcmask 457728
        %v678 = vsel %vm677, %v669, %v577
        %v679 = vsel %vm677, %v670, %v579
        %v680 = vsel %vm677, %v671, %v581
        %v681 = vsel %vm677, %v672, %v583
        %v682 = vsel %vm677, %v673, %v585
        %v683 = vsel %vm677, %v674, %v587
        %v684 = vsel %vm677, %v675, %v589
        %v685 = vsel %vm677, %v676, %v591
        %vm686 = vcmask 523264
        %v687 = vsel %vm686, %v678, %v601
        %v688 = vsel %vm686, %v679, %v603
        %v689 = vsel %vm686, %v680, %v605
        %v690 = vsel %vm686, %v681, %v607
        %v691 = vsel %vm686, %v682, %v609
        %v692 = vsel %vm686, %v683, %v611
        %v693 = vsel %vm686, %v684, %v613
        %v694 = vsel %vm686, %v685, %v615
        %v695 = vld [vmem:[#allocation3] sm:$0xff]
        %v696 = vld [vmem:[#allocation3 + $0x8] sm:$0xff]
        %v697 = vld [vmem:[#allocation3 + $0x10] sm:$0xff]
        %v698 = vld [vmem:[#allocation3 + $0x18] sm:$0xff]
        %v699 = vld [vmem:[#allocation3 + $0x20] sm:$0xff]
        %v700 = vld [vmem:[#allocation3 + $0x28] sm:$0xff]
        %v701 = vld [vmem:[#allocation3 + $0x30] sm:$0xff]
        %v702 = vld [vmem:[#allocation3 + $0x38] sm:$0xff]
        %v703 = vld [vmem:[#allocation3 + $0x40] sm:$0xff]
        %vm704 = vcmask 588800
        %v706 = vsel %vm704, %v687, 0
        %v709 = vsel %vm704, %v688, 0
        %v712 = vsel %vm704, %v689, 0
        %v715 = vsel %vm704, %v690, 0
        %v718 = vsel %vm704, %v691, 0
        %v721 = vsel %vm704, %v692, 0
        %v724 = vsel %vm704, %v693, 0
        %v727 = vsel %vm704, %v694, 0
        %729 = vmatpush.msra.mxu0 0.0
        %730 = vmatpush.msra.mxu0 0.0
        %731 = vmatpush.msra.mxu0 0.0
        %732 = vmatpush.msra.mxu0 0.0
        %733 = vmatpush.msra.mxu0 0.0
        %734 = vmatpush.msra.mxu0 0.0
        %735 = vmatpush.msra.mxu0 0.0
        %736 = vmatpush.msra.mxu0 %v703
        %737 = vmatpush.msra.mxu0 %v702
        %738 = vmatpush.msra.mxu0 %v701
        %739 = vmatpush.msra.mxu0 %v700
        %740 = vmatpush.msra.mxu0 %v699
        %741 = vmatpush.msra.mxu0 %v698
        %742 = vmatpush.msra.mxu0 %v697
        %743 = vmatpush.msra.mxu0 %v696
        %744 = vmatpush.msra.mxu0 %v695
        %745 = vmatmul.f32.gmra.mxu0 %v706
        %v746 = vpop.f32.mrf.mxu0
        %v747 = vadd.f32 0.0, %v746
        %748 = vmatmul.f32.gmra.mxu0 %v709
        %v749 = vpop.f32.mrf.mxu0
        %v750 = vadd.f32 0.0, %v749
        %751 = vmatmul.f32.gmra.mxu0 %v712
        %v752 = vpop.f32.mrf.mxu0
        %v753 = vadd.f32 0.0, %v752
        %754 = vmatmul.f32.gmra.mxu0 %v715
        %v755 = vpop.f32.mrf.mxu0
        %v756 = vadd.f32 0.0, %v755
        %757 = vmatmul.f32.gmra.mxu0 %v718
        %v758 = vpop.f32.mrf.mxu0
        %v759 = vadd.f32 0.0, %v758
        %760 = vmatmul.f32.gmra.mxu0 %v721
        %v761 = vpop.f32.mrf.mxu0
        %v762 = vadd.f32 0.0, %v761
        %763 = vmatmul.f32.gmra.mxu0 %v724
        %v764 = vpop.f32.mrf.mxu0
        %v765 = vadd.f32 0.0, %v764
        %766 = vmatmul.f32.gmra.mxu0 %v727
        %v767 = vpop.f32.mrf.mxu0
        %v768 = vadd.f32 0.0, %v767
        %769 = vdwg.mxu0
        %770 = vst.msk [vmem:[%s248] sm:$0xff] %vm650, %v747
        %771 = vst.msk [vmem:[%s248 + $0x8] sm:$0xff] %vm650, %v750
        %772 = vst.msk [vmem:[%s248 + $0x10] sm:$0xff] %vm650, %v753
        %773 = vst.msk [vmem:[%s248 + $0x18] sm:$0xff] %vm650, %v756
        %774 = vst.msk [vmem:[%s248 + $0x20] sm:$0xff] %vm650, %v759
        %775 = vst.msk [vmem:[%s248 + $0x28] sm:$0xff] %vm650, %v762
        %776 = vst.msk [vmem:[%s248 + $0x30] sm:$0xff] %vm650, %v765
        %777 = vst.msk [vmem:[%s248 + $0x38] sm:$0xff] %vm650, %v768
        %v778 = vsel %vm650, %v747, 0.0
        %v779 = vsel %vm650, %v750, 0.0
        %v780 = vadd.f32 %v778, %v779
        %v781 = vsel %vm650, %v753, 0.0
        %v782 = vadd.f32 %v780, %v781
        %v783 = vsel %vm650, %v756, 0.0
        %v784 = vadd.f32 %v782, %v783
        %v785 = vsel %vm650, %v759, 0.0
        %v786 = vadd.f32 %v784, %v785
        %v787 = vsel %vm650, %v762, 0.0
        %v788 = vadd.f32 %v786, %v787
        %v789 = vsel %vm650, %v765, 0.0
        %v790 = vadd.f32 %v788, %v789
        %v791 = vsel %vm650, %v768, 0.0
        %v792 = vadd.f32 %v790, %v791
        %v793 = vrot.slane %v792, 4
        %v794 = vadd.f32 %v792, %v793
        %v795 = vrot.slane %v794, 2
        %v796 = vadd.f32 %v794, %v795
        %v797 = vrot.slane %v796, 1
        %v798 = vadd.f32 %v796, %v797
        %v799 = vmul.f32 %v747, %v747
        %v800 = vmul.f32 %v750, %v750
        %v801 = vmul.f32 %v753, %v753
        %v802 = vmul.f32 %v756, %v756
        %v803 = vmul.f32 %v759, %v759
        %v804 = vmul.f32 %v762, %v762
        %v805 = vmul.f32 %v765, %v765
        %v806 = vmul.f32 %v768, %v768
        %v807 = vsel %vm650, %v799, 0.0
        %v808 = vsel %vm650, %v800, 0.0
        %v809 = vadd.f32 %v807, %v808
        %v810 = vsel %vm650, %v801, 0.0
        %v811 = vadd.f32 %v809, %v810
        %v812 = vsel %vm650, %v802, 0.0
        %v813 = vadd.f32 %v811, %v812
        %v814 = vsel %vm650, %v803, 0.0
        %v815 = vadd.f32 %v813, %v814
        %v816 = vsel %vm650, %v804, 0.0
        %v817 = vadd.f32 %v815, %v816
        %v818 = vsel %vm650, %v805, 0.0
        %v819 = vadd.f32 %v817, %v818
        %v820 = vsel %vm650, %v806, 0.0
        %v821 = vadd.f32 %v819, %v820
        %v822 = vrot.slane %v821, 4
        %v823 = vadd.f32 %v821, %v822
        %v824 = vrot.slane %v823, 2
        %v825 = vadd.f32 %v823, %v824
        %v826 = vrot.slane %v825, 1
        %v827 = vadd.f32 %v825, %v826
        %vm828 = vcmask 1040384
        %v829 = vsel %vm828, %v798, %v827
        %vm830 = vcmask 254976
        %831 = vst.msk [vmem:[%s252] sm:$0x3] %vm830, %v829
        %p832 = scmp.lt.s32.totalorder %s18, 1
        %s833 = scalar_select %p832, %s18, 1
        %s834 = smul.addr %s833, 8
        %s835 = smul.addr %s834, 8
        %s836 = scalar_lea.vmem %s4, %s835
        %p837 = scmp.lt.s32.totalorder %s18, 1
        %s838 = scalar_select %p837, %s18, 1
        %s839 = smul.addr %s838, 2
        %s840 = scalar_lea.vmem %s5, %s839
        // Predicated region
        $region41: #{_lambda_.5} parent=35 // pred_check
          %p841 = pneg %p125
        $region42: #{_lambda_.5} parent=35 // pred_check_branch
          %843 = sbr.rel (%p841) target = $region44
        $region43: #{_lambda_.5} parent=35 // pred_region
          _
        $region44: #{_lambda_.5} parent=35 // pred_fallthru
          _
        // Predicated region
        $region45: #{_lambda_.5} parent=35 // pred_check
          %p844 = pneg %p151
        $region46: #{_lambda_.5} parent=35 // pred_check_branch
          %846 = sbr.rel (%p844) target = $region48
        $region47: #{_lambda_.5} parent=35 // pred_region
          _
        $region48: #{_lambda_.5} parent=35 // pred_fallthru
          _
      $region36: #{_lambda_.5} parent=5 // pred_fallthru
        _
      %p847 = scmp.le.s32.totalorder 2, %s13
      // Predicated region
      $region49: #{_lambda_.5} parent=5 // pred_check
        %p848 = pneg %p847
      $region50: #{_lambda_.5} parent=5 // pred_check_branch
        %850 = sbr.rel (%p848) target = $region52
      $region51: #{_lambda_.5} parent=5 // pred_region
        %s851 = ssub.s32 %s13, 2
        // Predicated region
        $region53: #{_lambda_.5} parent=51 // pred_check
          %p852 = pneg %p131
        $region54: #{_lambda_.5} parent=51 // pred_check_branch
          %854 = sbr.rel (%p852) target = $region56
        $region55: #{_lambda_.5} parent=51 // pred_region
          %p855 = scmp.lt.s32.totalorder %s19, 1
          %s856 = scalar_select %p855, %s19, 1
          %s857 = smul.addr %s856, 8
          %s858 = smul.addr %s857, 8
          %s859 = scalar_lea.vmem %s4, %s858
        $region56: #{_lambda_.5} parent=51 // pred_fallthru
          _
        // Predicated region
        $region57: #{_lambda_.5} parent=51 // pred_check
          %p860 = pneg %p157
        $region58: #{_lambda_.5} parent=51 // pred_check_branch
          %862 = sbr.rel (%p860) target = $region60
        $region59: #{_lambda_.5} parent=51 // pred_region
          %p863 = scmp.lt.s32.totalorder %s19, 1
          %s864 = scalar_select %p863, %s19, 1
          %s865 = smul.addr %s864, 2
          %s866 = scalar_lea.vmem %s5, %s865
        $region60: #{_lambda_.5} parent=51 // pred_fallthru
          _
      $region52: #{_lambda_.5} parent=5 // pred_fallthru
        _
    $region6: #{_lambda_.5} parent=1 // loop_footer
      %s17 = sadd.s32 1, %s13
    $region7: #{_lambda_.5} parent=1 // loop_footer_branch
      %12 = sbr.rel target = $region3
    $region8: #{_lambda_.5} parent=1 // loop_exit
      _
    %867 = vsyncpa [#allocation4], 1
    %s868 = scalar_lea.sflag [#allocation4], 1
    %869 = vsyncpa %s868, 1

// kernel: _lambda_.6
$region0: #{_lambda_.6}
  #allocation0 [shape = 'u32[]', space=smem, size = 0x4, offset = 0x4, fixed_abs, tag = 'smem constant byte address 0x4 - core index']
  #allocation1 [shape = 'u32[72,128]{1,0:T(1,128)}', space=vmem, size = 0x9000, scoped, tag = 'internal scratch']
  %s0 = inlined_call_operand.vmem [shape: f32[512,8], index: 0, kind: input, shape index: {}]
  %s1 = inlined_call_operand.vmem [shape: f32[1,8], index: 1, kind: input, shape index: {}]
  %s2 = inlined_call_operand.vmem [shape: f32[1,8], index: 2, kind: input, shape index: {}]
  %s3 = inlined_call_operand.vmem [shape: f32[8,16], index: 3, kind: input, shape index: {}]
  %s4 = inlined_call_operand.vmem [shape: f32[512,16], index: 4, kind: output, shape index: {0}]
  %s5 = inlined_call_operand.vmem [shape: f32[1,2,16], index: 5, kind: output, shape index: {1}]
  %6 = xla_tuple %s4, %s5
  %s7 = sld [smem:[#allocation0]]
  $region34: #{_lambda_.6} parent=0
    _
  %s9 = ssub.s32 1, %s7
  %s10 = scalar_select 0, %s9, %s7
  // Predicated region
  $region2: #{_lambda_.6} parent=0 // pred_check
    _
  $region3: #{_lambda_.6} parent=0 // pred_check_branch
    %12 = sbr.rel (0) target = $region5
  $region4: #{_lambda_.6} parent=0 // pred_region
    _
  $region5: #{_lambda_.6} parent=0 // pred_fallthru
    _
  // Predicated region
  $region6: #{_lambda_.6} parent=0 // pred_check
    _
  $region7: #{_lambda_.6} parent=0 // pred_check_branch
    %14 = sbr.rel (0) target = $region9
  $region8: #{_lambda_.6} parent=0 // pred_region
    _
  $region9: #{_lambda_.6} parent=0 // pred_fallthru
    _
  // Predicated region
  $region10: #{_lambda_.6} parent=0 // pred_check
    _
  $region11: #{_lambda_.6} parent=0 // pred_check_branch
    %16 = sbr.rel (0) target = $region13
  $region12: #{_lambda_.6} parent=0 // pred_region
    _
  $region13: #{_lambda_.6} parent=0 // pred_fallthru
    _
  // Predicated region
  $region14: #{_lambda_.6} parent=0 // pred_check
    _
  $region15: #{_lambda_.6} parent=0 // pred_check_branch
    %18 = sbr.rel (0) target = $region17
  $region16: #{_lambda_.6} parent=0 // pred_region
    _
  $region17: #{_lambda_.6} parent=0 // pred_fallthru
    _
  %v19 = vld [vmem:[%s0] sm:$0xff]
  %v20 = vld [vmem:[%s0 + $0x8] sm:$0xff]
  %v21 = vld [vmem:[%s0 + $0x10] sm:$0xff]
  %v22 = vld [vmem:[%s0 + $0x18] sm:$0xff]
  %v23 = vld [vmem:[%s0 + $0x20] sm:$0xff]
  %v24 = vld [vmem:[%s0 + $0x28] sm:$0xff]
  %v25 = vld [vmem:[%s0 + $0x30] sm:$0xff]
  %v26 = vld [vmem:[%s0 + $0x38] sm:$0xff]
  %v27 = vld [vmem:[%s0 + $0x40] sm:$0xff]
  %v28 = vld [vmem:[%s0 + $0x48] sm:$0xff]
  %v29 = vld [vmem:[%s0 + $0x50] sm:$0xff]
  %v30 = vld [vmem:[%s0 + $0x58] sm:$0xff]
  %v31 = vld [vmem:[%s0 + $0x60] sm:$0xff]
  %v32 = vld [vmem:[%s0 + $0x68] sm:$0xff]
  %v33 = vld [vmem:[%s0 + $0x70] sm:$0xff]
  %v34 = vld [vmem:[%s0 + $0x78] sm:$0xff]
  %v35 = vld [vmem:[%s0 + $0x80] sm:$0xff]
  %v36 = vld [vmem:[%s0 + $0x88] sm:$0xff]
  %v37 = vld [vmem:[%s0 + $0x90] sm:$0xff]
  %v38 = vld [vmem:[%s0 + $0x98] sm:$0xff]
  %v39 = vld [vmem:[%s0 + $0xa0] sm:$0xff]
  %v40 = vld [vmem:[%s0 + $0xa8] sm:$0xff]
  %v41 = vld [vmem:[%s0 + $0xb0] sm:$0xff]
  %v42 = vld [vmem:[%s0 + $0xb8] sm:$0xff]
  %v43 = vld [vmem:[%s0 + $0xc0] sm:$0xff]
  %v44 = vld [vmem:[%s0 + $0xc8] sm:$0xff]
  %v45 = vld [vmem:[%s0 + $0xd0] sm:$0xff]
  %v46 = vld [vmem:[%s0 + $0xd8] sm:$0xff]
  %v47 = vld [vmem:[%s0 + $0xe0] sm:$0xff]
  %v48 = vld [vmem:[%s0 + $0xe8] sm:$0xff]
  %v49 = vld [vmem:[%s0 + $0xf0] sm:$0xff]
  %v50 = vld [vmem:[%s0 + $0xf8] sm:$0xff]
  %v51 = vld [vmem:[%s0 + $0x100] sm:$0xff]
  %v52 = vld [vmem:[%s0 + $0x108] sm:$0xff]
  %v53 = vld [vmem:[%s0 + $0x110] sm:$0xff]
  %v54 = vld [vmem:[%s0 + $0x118] sm:$0xff]
  %v55 = vld [vmem:[%s0 + $0x120] sm:$0xff]
  %v56 = vld [vmem:[%s0 + $0x128] sm:$0xff]
  %v57 = vld [vmem:[%s0 + $0x130] sm:$0xff]
  %v58 = vld [vmem:[%s0 + $0x138] sm:$0xff]
  %v59 = vld [vmem:[%s0 + $0x140] sm:$0xff]
  %v60 = vld [vmem:[%s0 + $0x148] sm:$0xff]
  %v61 = vld [vmem:[%s0 + $0x150] sm:$0xff]
  %v62 = vld [vmem:[%s0 + $0x158] sm:$0xff]
  %v63 = vld [vmem:[%s0 + $0x160] sm:$0xff]
  %v64 = vld [vmem:[%s0 + $0x168] sm:$0xff]
  %v65 = vld [vmem:[%s0 + $0x170] sm:$0xff]
  %v66 = vld [vmem:[%s0 + $0x178] sm:$0xff]
  %v67 = vld [vmem:[%s0 + $0x180] sm:$0xff]
  %v68 = vld [vmem:[%s0 + $0x188] sm:$0xff]
  %v69 = vld [vmem:[%s0 + $0x190] sm:$0xff]
  %v70 = vld [vmem:[%s0 + $0x198] sm:$0xff]
  %v71 = vld [vmem:[%s0 + $0x1a0] sm:$0xff]
  %v72 = vld [vmem:[%s0 + $0x1a8] sm:$0xff]
  %v73 = vld [vmem:[%s0 + $0x1b0] sm:$0xff]
  %v74 = vld [vmem:[%s0 + $0x1b8] sm:$0xff]
  %v75 = vld [vmem:[%s0 + $0x1c0] sm:$0xff]
  %v76 = vld [vmem:[%s0 + $0x1c8] sm:$0xff]
  %v77 = vld [vmem:[%s0 + $0x1d0] sm:$0xff]
  %v78 = vld [vmem:[%s0 + $0x1d8] sm:$0xff]
  %v79 = vld [vmem:[%s0 + $0x1e0] sm:$0xff]
  %v80 = vld [vmem:[%s0 + $0x1e8] sm:$0xff]
  %v81 = vld [vmem:[%s0 + $0x1f0] sm:$0xff]
  %v82 = vld [vmem:[%s0 + $0x1f8] sm:$0xff]
  %v83 = vld [vmem:[%s1] sm:$0x1]
  %v85 = vperm.slane %v83, 0
  %v87 = vmul.f32 %v19, %v85
  %v88 = vmul.f32 %v20, %v85
  %v89 = vmul.f32 %v21, %v85
  %v90 = vmul.f32 %v22, %v85
  %v91 = vmul.f32 %v23, %v85
  %v92 = vmul.f32 %v24, %v85
  %v93 = vmul.f32 %v25, %v85
  %v94 = vmul.f32 %v26, %v85
  %v95 = vmul.f32 %v27, %v85
  %v96 = vmul.f32 %v28, %v85
  %v97 = vmul.f32 %v29, %v85
  %v98 = vmul.f32 %v30, %v85
  %v99 = vmul.f32 %v31, %v85
  %v100 = vmul.f32 %v32, %v85
  %v101 = vmul.f32 %v33, %v85
  %v102 = vmul.f32 %v34, %v85
  %v103 = vmul.f32 %v35, %v85
  %v104 = vmul.f32 %v36, %v85
  %v105 = vmul.f32 %v37, %v85
  %v106 = vmul.f32 %v38, %v85
  %v107 = vmul.f32 %v39, %v85
  %v108 = vmul.f32 %v40, %v85
  %v109 = vmul.f32 %v41, %v85
  %v110 = vmul.f32 %v42, %v85
  %v111 = vmul.f32 %v43, %v85
  %v112 = vmul.f32 %v44, %v85
  %v113 = vmul.f32 %v45, %v85
  %v114 = vmul.f32 %v46, %v85
  %v115 = vmul.f32 %v47, %v85
  %v116 = vmul.f32 %v48, %v85
  %v117 = vmul.f32 %v49, %v85
  %v118 = vmul.f32 %v50, %v85
  %v119 = vmul.f32 %v51, %v85
  %v120 = vmul.f32 %v52, %v85
  %v121 = vmul.f32 %v53, %v85
  %v122 = vmul.f32 %v54, %v85
  %v123 = vmul.f32 %v55, %v85
  %v124 = vmul.f32 %v56, %v85
  %v125 = vmul.f32 %v57, %v85
  %v126 = vmul.f32 %v58, %v85
  %v127 = vmul.f32 %v59, %v85
  %v128 = vmul.f32 %v60, %v85
  %v129 = vmul.f32 %v61, %v85
  %v130 = vmul.f32 %v62, %v85
  %v131 = vmul.f32 %v63, %v85
  %v132 = vmul.f32 %v64, %v85
  %v133 = vmul.f32 %v65, %v85
  %v134 = vmul.f32 %v66, %v85
  %v135 = vmul.f32 %v67, %v85
  %v136 = vmul.f32 %v68, %v85
  %v137 = vmul.f32 %v69, %v85
  %v138 = vmul.f32 %v70, %v85
  %v139 = vmul.f32 %v71, %v85
  %v140 = vmul.f32 %v72, %v85
  %v141 = vmul.f32 %v73, %v85
  %v142 = vmul.f32 %v74, %v85
  %v143 = vmul.f32 %v75, %v85
  %v144 = vmul.f32 %v76, %v85
  %v145 = vmul.f32 %v77, %v85
  %v146 = vmul.f32 %v78, %v85
  %v147 = vmul.f32 %v79, %v85
  %v148 = vmul.f32 %v80, %v85
  %v149 = vmul.f32 %v81, %v85
  %v150 = vmul.f32 %v82, %v85
  %v151 = vld [vmem:[%s2] sm:$0x1]
  %v153 = vperm.slane %v151, 0
  %v155 = vadd.f32 %v87, %v153
  %v156 = vadd.f32 %v88, %v153
  %v157 = vadd.f32 %v89, %v153
  %v158 = vadd.f32 %v90, %v153
  %v159 = vadd.f32 %v91, %v153
  %v160 = vadd.f32 %v92, %v153
  %v161 = vadd.f32 %v93, %v153
  %v162 = vadd.f32 %v94, %v153
  %v163 = vadd.f32 %v95, %v153
  %v164 = vadd.f32 %v96, %v153
  %v165 = vadd.f32 %v97, %v153
  %v166 = vadd.f32 %v98, %v153
  %v167 = vadd.f32 %v99, %v153
  %v168 = vadd.f32 %v100, %v153
  %v169 = vadd.f32 %v101, %v153
  %v170 = vadd.f32 %v102, %v153
  %v171 = vadd.f32 %v103, %v153
  %v172 = vadd.f32 %v104, %v153
  %v173 = vadd.f32 %v105, %v153
  %v174 = vadd.f32 %v106, %v153
  %v175 = vadd.f32 %v107, %v153
  %v176 = vadd.f32 %v108, %v153
  %v177 = vadd.f32 %v109, %v153
  %v178 = vadd.f32 %v110, %v153
  %v179 = vadd.f32 %v111, %v153
  %v180 = vadd.f32 %v112, %v153
  %v181 = vadd.f32 %v113, %v153
  %v182 = vadd.f32 %v114, %v153
  %v183 = vadd.f32 %v115, %v153
  %v184 = vadd.f32 %v116, %v153
  %v185 = vadd.f32 %v117, %v153
  %v186 = vadd.f32 %v118, %v153
  %v187 = vadd.f32 %v119, %v153
  %v188 = vadd.f32 %v120, %v153
  %v189 = vadd.f32 %v121, %v153
  %v190 = vadd.f32 %v122, %v153
  %v191 = vadd.f32 %v123, %v153
  %v192 = vadd.f32 %v124, %v153
  %v193 = vadd.f32 %v125, %v153
  %v194 = vadd.f32 %v126, %v153
  %v195 = vadd.f32 %v127, %v153
  %v196 = vadd.f32 %v128, %v153
  %v197 = vadd.f32 %v129, %v153
  %v198 = vadd.f32 %v130, %v153
  %v199 = vadd.f32 %v131, %v153
  %v200 = vadd.f32 %v132, %v153
  %v201 = vadd.f32 %v133, %v153
  %v202 = vadd.f32 %v134, %v153
  %v203 = vadd.f32 %v135, %v153
  %v204 = vadd.f32 %v136, %v153
  %v205 = vadd.f32 %v137, %v153
  %v206 = vadd.f32 %v138, %v153
  %v207 = vadd.f32 %v139, %v153
  %v208 = vadd.f32 %v140, %v153
  %v209 = vadd.f32 %v141, %v153
  %v210 = vadd.f32 %v142, %v153
  %v211 = vadd.f32 %v143, %v153
  %v212 = vadd.f32 %v144, %v153
  %v213 = vadd.f32 %v145, %v153
  %v214 = vadd.f32 %v146, %v153
  %v215 = vadd.f32 %v147, %v153
  %v216 = vadd.f32 %v148, %v153
  %v217 = vadd.f32 %v149, %v153
  %v218 = vadd.f32 %v150, %v153
  %v219 = vmax.f32 %v155, 0.0
  %v220 = vmax.f32 %v156, 0.0
  %v221 = vmax.f32 %v157, 0.0
  %v222 = vmax.f32 %v158, 0.0
  %v223 = vmax.f32 %v159, 0.0
  %v224 = vmax.f32 %v160, 0.0
  %v225 = vmax.f32 %v161, 0.0
  %v226 = vmax.f32 %v162, 0.0
  %v227 = vmax.f32 %v163, 0.0
  %v228 = vmax.f32 %v164, 0.0
  %v229 = vmax.f32 %v165, 0.0
  %v230 = vmax.f32 %v166, 0.0
  %v231 = vmax.f32 %v167, 0.0
  %v232 = vmax.f32 %v168, 0.0
  %v233 = vmax.f32 %v169, 0.0
  %v234 = vmax.f32 %v170, 0.0
  %v235 = vmax.f32 %v171, 0.0
  %v236 = vmax.f32 %v172, 0.0
  %v237 = vmax.f32 %v173, 0.0
  %v238 = vmax.f32 %v174, 0.0
  %v239 = vmax.f32 %v175, 0.0
  %v240 = vmax.f32 %v176, 0.0
  %v241 = vmax.f32 %v177, 0.0
  %v242 = vmax.f32 %v178, 0.0
  %v243 = vmax.f32 %v179, 0.0
  %v244 = vmax.f32 %v180, 0.0
  %v245 = vmax.f32 %v181, 0.0
  %v246 = vmax.f32 %v182, 0.0
  %v247 = vmax.f32 %v183, 0.0
  %v248 = vmax.f32 %v184, 0.0
  %v249 = vmax.f32 %v185, 0.0
  %v250 = vmax.f32 %v186, 0.0
  %v251 = vmax.f32 %v187, 0.0
  %v252 = vmax.f32 %v188, 0.0
  %v253 = vmax.f32 %v189, 0.0
  %v254 = vmax.f32 %v190, 0.0
  %v255 = vmax.f32 %v191, 0.0
  %v256 = vmax.f32 %v192, 0.0
  %v257 = vmax.f32 %v193, 0.0
  %v258 = vmax.f32 %v194, 0.0
  %v259 = vmax.f32 %v195, 0.0
  %v260 = vmax.f32 %v196, 0.0
  %v261 = vmax.f32 %v197, 0.0
  %v262 = vmax.f32 %v198, 0.0
  %v263 = vmax.f32 %v199, 0.0
  %v264 = vmax.f32 %v200, 0.0
  %v265 = vmax.f32 %v201, 0.0
  %v266 = vmax.f32 %v202, 0.0
  %v267 = vmax.f32 %v203, 0.0
  %v268 = vmax.f32 %v204, 0.0
  %v269 = vmax.f32 %v205, 0.0
  %v270 = vmax.f32 %v206, 0.0
  %v271 = vmax.f32 %v207, 0.0
  %v272 = vmax.f32 %v208, 0.0
  %v273 = vmax.f32 %v209, 0.0
  %v274 = vmax.f32 %v210, 0.0
  %v275 = vmax.f32 %v211, 0.0
  %v276 = vmax.f32 %v212, 0.0
  %v277 = vmax.f32 %v213, 0.0
  %v278 = vmax.f32 %v214, 0.0
  %v279 = vmax.f32 %v215, 0.0
  %v280 = vmax.f32 %v216, 0.0
  %v281 = vmax.f32 %v217, 0.0
  %v282 = vmax.f32 %v218, 0.0
  %v283 = vld [vmem:[%s3] sm:$0xff]
  %vm284 = vcmask 64512
  %v286 = vsel %vm284, %v219, 0
  %v289 = vsel %vm284, %v220, 0
  %v292 = vsel %vm284, %v221, 0
  %v295 = vsel %vm284, %v222, 0
  %v298 = vsel %vm284, %v223, 0
  %v301 = vsel %vm284, %v224, 0
  %v304 = vsel %vm284, %v225, 0
  %v307 = vsel %vm284, %v226, 0
  %v310 = vsel %vm284, %v227, 0
  %v313 = vsel %vm284, %v228, 0
  %v316 = vsel %vm284, %v229, 0
  %v319 = vsel %vm284, %v230, 0
  %v322 = vsel %vm284, %v231, 0
  %v325 = vsel %vm284, %v232, 0
  %v328 = vsel %vm284, %v233, 0
  %v331 = vsel %vm284, %v234, 0
  %v334 = vsel %vm284, %v235, 0
  %v337 = vsel %vm284, %v236, 0
  %v340 = vsel %vm284, %v237, 0
  %v343 = vsel %vm284, %v238, 0
  %v346 = vsel %vm284, %v239, 0
  %v349 = vsel %vm284, %v240, 0
  %v352 = vsel %vm284, %v241, 0
  %v355 = vsel %vm284, %v242, 0
  %v358 = vsel %vm284, %v243, 0
  %v361 = vsel %vm284, %v244, 0
  %v364 = vsel %vm284, %v245, 0
  %v367 = vsel %vm284, %v246, 0
  %v370 = vsel %vm284, %v247, 0
  %v373 = vsel %vm284, %v248, 0
  %v376 = vsel %vm284, %v249, 0
  %v379 = vsel %vm284, %v250, 0
  %v382 = vsel %vm284, %v251, 0
  %v385 = vsel %vm284, %v252, 0
  %v388 = vsel %vm284, %v253, 0
  %v391 = vsel %vm284, %v254, 0
  %v394 = vsel %vm284, %v255, 0
  %v397 = vsel %vm284, %v256, 0
  %v400 = vsel %vm284, %v257, 0
  %v403 = vsel %vm284, %v258, 0
  %v406 = vsel %vm284, %v259, 0
  %v409 = vsel %vm284, %v260, 0
  %v412 = vsel %vm284, %v261, 0
  %v415 = vsel %vm284, %v262, 0
  %v418 = vsel %vm284, %v263, 0
  %v421 = vsel %vm284, %v264, 0
  %v424 = vsel %vm284, %v265, 0
  %v427 = vsel %vm284, %v266, 0
  %v430 = vsel %vm284, %v267, 0
  %v433 = vsel %vm284, %v268, 0
  %v436 = vsel %vm284, %v269, 0
  %v439 = vsel %vm284, %v270, 0
  %v442 = vsel %vm284, %v271, 0
  %v445 = vsel %vm284, %v272, 0
  %v448 = vsel %vm284, %v273, 0
  %v451 = vsel %vm284, %v274, 0
  %v454 = vsel %vm284, %v275, 0
  %v457 = vsel %vm284, %v276, 0
  %v460 = vsel %vm284, %v277, 0
  %v463 = vsel %vm284, %v278, 0
  %v466 = vsel %vm284, %v279, 0
  %v469 = vsel %vm284, %v280, 0
  %v472 = vsel %vm284, %v281, 0
  %v475 = vsel %vm284, %v282, 0
  %477 = vmatpush.msra.mxu0 0.0
  %478 = vmatpush.msra.mxu0 0.0
  %479 = vmatpush.msra.mxu0 0.0
  %480 = vmatpush.msra.mxu0 0.0
  %481 = vmatpush.msra.mxu0 0.0
  %482 = vmatpush.msra.mxu0 0.0
  %483 = vmatpush.msra.mxu0 0.0
  %484 = vmatpush.msra.mxu0 0.0
  %485 = vmatpush.msra.mxu0 0.0
  %486 = vmatpush.msra.mxu0 0.0
  %487 = vmatpush.msra.mxu0 0.0
  %488 = vmatpush.msra.mxu0 0.0
  %489 = vmatpush.msra.mxu0 0.0
  %490 = vmatpush.msra.mxu0 0.0
  %491 = vmatpush.msra.mxu0 0.0
  %492 = vmatpush.msra.mxu0 %v283
  %493 = vmatmul.f32.gmra.mxu0 %v286
  %v494 = vpop.f32.mrf.mxu0
  %v495 = vadd.f32 0.0, %v494
  %496 = vmatmul.f32.gmra.mxu0 %v289
  %v497 = vpop.f32.mrf.mxu0
  %v498 = vadd.f32 0.0, %v497
  %499 = vmatmul.f32.gmra.mxu0 %v292
  %v500 = vpop.f32.mrf.mxu0
  %v501 = vadd.f32 0.0, %v500
  %502 = vmatmul.f32.gmra.mxu0 %v295
  %v503 = vpop.f32.mrf.mxu0
  %v504 = vadd.f32 0.0, %v503
  %505 = vmatmul.f32.gmra.mxu0 %v298
  %v506 = vpop.f32.mrf.mxu0
  %v507 = vadd.f32 0.0, %v506
  %508 = vmatmul.f32.gmra.mxu0 %v301
  %v509 = vpop.f32.mrf.mxu0
  %v510 = vadd.f32 0.0, %v509
  %511 = vmatmul.f32.gmra.mxu0 %v304
  %v512 = vpop.f32.mrf.mxu0
  %v513 = vadd.f32 0.0, %v512
  %514 = vmatmul.f32.gmra.mxu0 %v307
  %v515 = vpop.f32.mrf.mxu0
  %v516 = vadd.f32 0.0, %v515
  %517 = vmatmul.f32.gmra.mxu0 %v310
  %v518 = vpop.f32.mrf.mxu0
  %v519 = vadd.f32 0.0, %v518
  %520 = vmatmul.f32.gmra.mxu0 %v313
  %v521 = vpop.f32.mrf.mxu0
  %v522 = vadd.f32 0.0, %v521
  %523 = vmatmul.f32.gmra.mxu0 %v316
  %v524 = vpop.f32.mrf.mxu0
  %v525 = vadd.f32 0.0, %v524
  %526 = vmatmul.f32.gmra.mxu0 %v319
  %v527 = vpop.f32.mrf.mxu0
  %v528 = vadd.f32 0.0, %v527
  %529 = vmatmul.f32.gmra.mxu0 %v322
  %v530 = vpop.f32.mrf.mxu0
  %v531 = vadd.f32 0.0, %v530
  %532 = vmatmul.f32.gmra.mxu0 %v325
  %v533 = vpop.f32.mrf.mxu0
  %v534 = vadd.f32 0.0, %v533
  %535 = vmatmul.f32.gmra.mxu0 %v328
  %v536 = vpop.f32.mrf.mxu0
  %v537 = vadd.f32 0.0, %v536
  %538 = vmatmul.f32.gmra.mxu0 %v331
  %v539 = vpop.f32.mrf.mxu0
  %v540 = vadd.f32 0.0, %v539
  %541 = vmatmul.f32.gmra.mxu0 %v334
  %v542 = vpop.f32.mrf.mxu0
  %v543 = vadd.f32 0.0, %v542
  %544 = vmatmul.f32.gmra.mxu0 %v337
  %v545 = vpop.f32.mrf.mxu0
  %v546 = vadd.f32 0.0, %v545
  %547 = vmatmul.f32.gmra.mxu0 %v340
  %v548 = vpop.f32.mrf.mxu0
  %v549 = vadd.f32 0.0, %v548
  %550 = vmatmul.f32.gmra.mxu0 %v343
  %v551 = vpop.f32.mrf.mxu0
  %v552 = vadd.f32 0.0, %v551
  %553 = vmatmul.f32.gmra.mxu0 %v346
  %v554 = vpop.f32.mrf.mxu0
  %v555 = vadd.f32 0.0, %v554
  %556 = vmatmul.f32.gmra.mxu0 %v349
  %v557 = vpop.f32.mrf.mxu0
  %v558 = vadd.f32 0.0, %v557
  %559 = vmatmul.f32.gmra.mxu0 %v352
  %v560 = vpop.f32.mrf.mxu0
  %v561 = vadd.f32 0.0, %v560
  %562 = vmatmul.f32.gmra.mxu0 %v355
  %v563 = vpop.f32.mrf.mxu0
  %v564 = vadd.f32 0.0, %v563
  %565 = vmatmul.f32.gmra.mxu0 %v358
  %v566 = vpop.f32.mrf.mxu0
  %v567 = vadd.f32 0.0, %v566
  %568 = vmatmul.f32.gmra.mxu0 %v361
  %v569 = vpop.f32.mrf.mxu0
  %v570 = vadd.f32 0.0, %v569
  %571 = vmatmul.f32.gmra.mxu0 %v364
  %v572 = vpop.f32.mrf.mxu0
  %v573 = vadd.f32 0.0, %v572
  %574 = vmatmul.f32.gmra.mxu0 %v367
  %v575 = vpop.f32.mrf.mxu0
  %v576 = vadd.f32 0.0, %v575
  %577 = vmatmul.f32.gmra.mxu0 %v370
  %v578 = vpop.f32.mrf.mxu0
  %v579 = vadd.f32 0.0, %v578
  %580 = vmatmul.f32.gmra.mxu0 %v373
  %v581 = vpop.f32.mrf.mxu0
  %v582 = vadd.f32 0.0, %v581
  %583 = vmatmul.f32.gmra.mxu0 %v376
  %v584 = vpop.f32.mrf.mxu0
  %v585 = vadd.f32 0.0, %v584
  %586 = vmatmul.f32.gmra.mxu0 %v379
  %v587 = vpop.f32.mrf.mxu0
  %v588 = vadd.f32 0.0, %v587
  %589 = vmatmul.f32.gmra.mxu0 %v382
  %v590 = vpop.f32.mrf.mxu0
  %v591 = vadd.f32 0.0, %v590
  %592 = vmatmul.f32.gmra.mxu0 %v385
  %v593 = vpop.f32.mrf.mxu0
  %v594 = vadd.f32 0.0, %v593
  %595 = vmatmul.f32.gmra.mxu0 %v388
  %v596 = vpop.f32.mrf.mxu0
  %v597 = vadd.f32 0.0, %v596
  %598 = vmatmul.f32.gmra.mxu0 %v391
  %v599 = vpop.f32.mrf.mxu0
  %v600 = vadd.f32 0.0, %v599
  %601 = vmatmul.f32.gmra.mxu0 %v394
  %v602 = vpop.f32.mrf.mxu0
  %v603 = vadd.f32 0.0, %v602
  %604 = vmatmul.f32.gmra.mxu0 %v397
  %v605 = vpop.f32.mrf.mxu0
  %v606 = vadd.f32 0.0, %v605
  %607 = vmatmul.f32.gmra.mxu0 %v400
  %v608 = vpop.f32.mrf.mxu0
  %v609 = vadd.f32 0.0, %v608
  %610 = vmatmul.f32.gmra.mxu0 %v403
  %v611 = vpop.f32.mrf.mxu0
  %v612 = vadd.f32 0.0, %v611
  %613 = vmatmul.f32.gmra.mxu0 %v406
  %v614 = vpop.f32.mrf.mxu0
  %v615 = vadd.f32 0.0, %v614
  %616 = vmatmul.f32.gmra.mxu0 %v409
  %v617 = vpop.f32.mrf.mxu0
  %v618 = vadd.f32 0.0, %v617
  %619 = vmatmul.f32.gmra.mxu0 %v412
  %v620 = vpop.f32.mrf.mxu0
  %v621 = vadd.f32 0.0, %v620
  %622 = vmatmul.f32.gmra.mxu0 %v415
  %v623 = vpop.f32.mrf.mxu0
  %v624 = vadd.f32 0.0, %v623
  %625 = vmatmul.f32.gmra.mxu0 %v418
  %v626 = vpop.f32.mrf.mxu0
  %v627 = vadd.f32 0.0, %v626
  %628 = vmatmul.f32.gmra.mxu0 %v421
  %v629 = vpop.f32.mrf.mxu0
  %v630 = vadd.f32 0.0, %v629
  %631 = vmatmul.f32.gmra.mxu0 %v424
  %v632 = vpop.f32.mrf.mxu0
  %v633 = vadd.f32 0.0, %v632
  %634 = vmatmul.f32.gmra.mxu0 %v427
  %v635 = vpop.f32.mrf.mxu0
  %v636 = vadd.f32 0.0, %v635
  %637 = vmatmul.f32.gmra.mxu0 %v430
  %v638 = vpop.f32.mrf.mxu0
  %v639 = vadd.f32 0.0, %v638
  %640 = vmatmul.f32.gmra.mxu0 %v433
  %v641 = vpop.f32.mrf.mxu0
  %v642 = vadd.f32 0.0, %v641
  %643 = vmatmul.f32.gmra.mxu0 %v436
  %v644 = vpop.f32.mrf.mxu0
  %v645 = vadd.f32 0.0, %v644
  %646 = vmatmul.f32.gmra.mxu0 %v439
  %v647 = vpop.f32.mrf.mxu0
  %v648 = vadd.f32 0.0, %v647
  %649 = vmatmul.f32.gmra.mxu0 %v442
  %v650 = vpop.f32.mrf.mxu0
  %v651 = vadd.f32 0.0, %v650
  %652 = vmatmul.f32.gmra.mxu0 %v445
  %v653 = vpop.f32.mrf.mxu0
  %v654 = vadd.f32 0.0, %v653
  %655 = vmatmul.f32.gmra.mxu0 %v448
  %v656 = vpop.f32.mrf.mxu0
  %v657 = vadd.f32 0.0, %v656
  %658 = vmatmul.f32.gmra.mxu0 %v451
  %v659 = vpop.f32.mrf.mxu0
  %v660 = vadd.f32 0.0, %v659
  %661 = vmatmul.f32.gmra.mxu0 %v454
  %v662 = vpop.f32.mrf.mxu0
  %v663 = vadd.f32 0.0, %v662
  %664 = vmatmul.f32.gmra.mxu0 %v457
  %v665 = vpop.f32.mrf.mxu0
  %v666 = vadd.f32 0.0, %v665
  %667 = vmatmul.f32.gmra.mxu0 %v460
  %v668 = vpop.f32.mrf.mxu0
  %v669 = vadd.f32 0.0, %v668
  %670 = vmatmul.f32.gmra.mxu0 %v463
  %v671 = vpop.f32.mrf.mxu0
  %v672 = vadd.f32 0.0, %v671
  %673 = vmatmul.f32.gmra.mxu0 %v466
  %v674 = vpop.f32.mrf.mxu0
  %v675 = vadd.f32 0.0, %v674
  %676 = vmatmul.f32.gmra.mxu0 %v469
  %v677 = vpop.f32.mrf.mxu0
  %v678 = vadd.f32 0.0, %v677
  %679 = vmatmul.f32.gmra.mxu0 %v472
  %v680 = vpop.f32.mrf.mxu0
  %v681 = vadd.f32 0.0, %v680
  %682 = vmatmul.f32.gmra.mxu0 %v475
  %v683 = vpop.f32.mrf.mxu0
  %v684 = vadd.f32 0.0, %v683
  %685 = vdwg.mxu0
  %vm686 = vcmask 130048
  %687 = vst.msk [vmem:[%s4] sm:$0xff] %vm686, %v495
  %688 = vst.msk [vmem:[%s4 + $0x8] sm:$0xff] %vm686, %v498
  %689 = vst.msk [vmem:[%s4 + $0x10] sm:$0xff] %vm686, %v501
  %690 = vst.msk [vmem:[%s4 + $0x18] sm:$0xff] %vm686, %v504
  %691 = vst.msk [vmem:[%s4 + $0x20] sm:$0xff] %vm686, %v507
  %692 = vst.msk [vmem:[%s4 + $0x28] sm:$0xff] %vm686, %v510
  %693 = vst.msk [vmem:[%s4 + $0x30] sm:$0xff] %vm686, %v513
  %694 = vst.msk [vmem:[%s4 + $0x38] sm:$0xff] %vm686, %v516
  %695 = vst.msk [vmem:[%s4 + $0x40] sm:$0xff] %vm686, %v519
  %696 = vst.msk [vmem:[%s4 + $0x48] sm:$0xff] %vm686, %v522
  %697 = vst.msk [vmem:[%s4 + $0x50] sm:$0xff] %vm686, %v525
  %698 = vst.msk [vmem:[%s4 + $0x58] sm:$0xff] %vm686, %v528
  %699 = vst.msk [vmem:[%s4 + $0x60] sm:$0xff] %vm686, %v531
  %700 = vst.msk [vmem:[%s4 + $0x68] sm:$0xff] %vm686, %v534
  %701 = vst.msk [vmem:[%s4 + $0x70] sm:$0xff] %vm686, %v537
  %702 = vst.msk [vmem:[%s4 + $0x78] sm:$0xff] %vm686, %v540
  %703 = vst.msk [vmem:[%s4 + $0x80] sm:$0xff] %vm686, %v543
  %704 = vst.msk [vmem:[%s4 + $0x88] sm:$0xff] %vm686, %v546
  %705 = vst.msk [vmem:[%s4 + $0x90] sm:$0xff] %vm686, %v549
  %706 = vst.msk [vmem:[%s4 + $0x98] sm:$0xff] %vm686, %v552
  %707 = vst.msk [vmem:[%s4 + $0xa0] sm:$0xff] %vm686, %v555
  %708 = vst.msk [vmem:[%s4 + $0xa8] sm:$0xff] %vm686, %v558
  %709 = vst.msk [vmem:[%s4 + $0xb0] sm:$0xff] %vm686, %v561
  %710 = vst.msk [vmem:[%s4 + $0xb8] sm:$0xff] %vm686, %v564
  %711 = vst.msk [vmem:[%s4 + $0xc0] sm:$0xff] %vm686, %v567
  %712 = vst.msk [vmem:[%s4 + $0xc8] sm:$0xff] %vm686, %v570
  %713 = vst.msk [vmem:[%s4 + $0xd0] sm:$0xff] %vm686, %v573
  %714 = vst.msk [vmem:[%s4 + $0xd8] sm:$0xff] %vm686, %v576
  %715 = vst.msk [vmem:[%s4 + $0xe0] sm:$0xff] %vm686, %v579
  %716 = vst.msk [vmem:[%s4 + $0xe8] sm:$0xff] %vm686, %v582
  %717 = vst.msk [vmem:[%s4 + $0xf0] sm:$0xff] %vm686, %v585
  %718 = vst.msk [vmem:[%s4 + $0xf8] sm:$0xff] %vm686, %v588
  %719 = vst.msk [vmem:[%s4 + $0x100] sm:$0xff] %vm686, %v591
  %720 = vst.msk [vmem:[%s4 + $0x108] sm:$0xff] %vm686, %v594
  %721 = vst.msk [vmem:[%s4 + $0x110] sm:$0xff] %vm686, %v597
  %722 = vst.msk [vmem:[%s4 + $0x118] sm:$0xff] %vm686, %v600
  %723 = vst.msk [vmem:[%s4 + $0x120] sm:$0xff] %vm686, %v603
  %724 = vst.msk [vmem:[%s4 + $0x128] sm:$0xff] %vm686, %v606
  %725 = vst.msk [vmem:[%s4 + $0x130] sm:$0xff] %vm686, %v609
  %726 = vst.msk [vmem:[%s4 + $0x138] sm:$0xff] %vm686, %v612
  %727 = vst.msk [vmem:[%s4 + $0x140] sm:$0xff] %vm686, %v615
  %728 = vst.msk [vmem:[%s4 + $0x148] sm:$0xff] %vm686, %v618
  %729 = vst.msk [vmem:[%s4 + $0x150] sm:$0xff] %vm686, %v621
  %730 = vst.msk [vmem:[%s4 + $0x158] sm:$0xff] %vm686, %v624
  %731 = vst.msk [vmem:[%s4 + $0x160] sm:$0xff] %vm686, %v627
  %732 = vst.msk [vmem:[%s4 + $0x168] sm:$0xff] %vm686, %v630
  %733 = vst.msk [vmem:[%s4 + $0x170] sm:$0xff] %vm686, %v633
  %734 = vst.msk [vmem:[%s4 + $0x178] sm:$0xff] %vm686, %v636
  %735 = vst.msk [vmem:[%s4 + $0x180] sm:$0xff] %vm686, %v639
  %736 = vst.msk [vmem:[%s4 + $0x188] sm:$0xff] %vm686, %v642
  %737 = vst.msk [vmem:[%s4 + $0x190] sm:$0xff] %vm686, %v645
  %738 = vst.msk [vmem:[%s4 + $0x198] sm:$0xff] %vm686, %v648
  %739 = vst.msk [vmem:[%s4 + $0x1a0] sm:$0xff] %vm686, %v651
  %740 = vst.msk [vmem:[%s4 + $0x1a8] sm:$0xff] %vm686, %v654
  %741 = vst.msk [vmem:[%s4 + $0x1b0] sm:$0xff] %vm686, %v657
  %742 = vst.msk [vmem:[%s4 + $0x1b8] sm:$0xff] %vm686, %v660
  %743 = vst.msk [vmem:[%s4 + $0x1c0] sm:$0xff] %vm686, %v663
  %744 = vst.msk [vmem:[%s4 + $0x1c8] sm:$0xff] %vm686, %v666
  %745 = vst.msk [vmem:[%s4 + $0x1d0] sm:$0xff] %vm686, %v669
  %746 = vst.msk [vmem:[%s4 + $0x1d8] sm:$0xff] %vm686, %v672
  %747 = vst.msk [vmem:[%s4 + $0x1e0] sm:$0xff] %vm686, %v675
  %748 = vst.msk [vmem:[%s4 + $0x1e8] sm:$0xff] %vm686, %v678
  %749 = vst.msk [vmem:[%s4 + $0x1f0] sm:$0xff] %vm686, %v681
  %750 = vst.msk [vmem:[%s4 + $0x1f8] sm:$0xff] %vm686, %v684
  %v751 = vsel %vm686, %v495, 0.0
  %v752 = vsel %vm686, %v498, 0.0
  %v753 = vadd.f32 %v751, %v752
  %v754 = vsel %vm686, %v501, 0.0
  %v755 = vadd.f32 %v753, %v754
  %v756 = vsel %vm686, %v504, 0.0
  %v757 = vadd.f32 %v755, %v756
  %v758 = vsel %vm686, %v507, 0.0
  %v759 = vadd.f32 %v757, %v758
  %v760 = vsel %vm686, %v510, 0.0
  %v761 = vadd.f32 %v759, %v760
  %v762 = vsel %vm686, %v513, 0.0
  %v763 = vadd.f32 %v761, %v762
  %v764 = vsel %vm686, %v516, 0.0
  %v765 = vadd.f32 %v763, %v764
  %v766 = vsel %vm686, %v519, 0.0
  %v767 = vadd.f32 %v765, %v766
  %v768 = vsel %vm686, %v522, 0.0
  %v769 = vadd.f32 %v767, %v768
  %v770 = vsel %vm686, %v525, 0.0
  %v771 = vadd.f32 %v769, %v770
  %v772 = vsel %vm686, %v528, 0.0
  %v773 = vadd.f32 %v771, %v772
  %v774 = vsel %vm686, %v531, 0.0
  %v775 = vadd.f32 %v773, %v774
  %v776 = vsel %vm686, %v534, 0.0
  %v777 = vadd.f32 %v775, %v776
  %v778 = vsel %vm686, %v537, 0.0
  %v779 = vadd.f32 %v777, %v778
  %v780 = vsel %vm686, %v540, 0.0
  %v781 = vadd.f32 %v779, %v780
  %v782 = vsel %vm686, %v543, 0.0
  %v783 = vadd.f32 %v781, %v782
  %v784 = vsel %vm686, %v546, 0.0
  %v785 = vadd.f32 %v783, %v784
  %v786 = vsel %vm686, %v549, 0.0
  %v787 = vadd.f32 %v785, %v786
  %v788 = vsel %vm686, %v552, 0.0
  %v789 = vadd.f32 %v787, %v788
  %v790 = vsel %vm686, %v555, 0.0
  %v791 = vadd.f32 %v789, %v790
  %v792 = vsel %vm686, %v558, 0.0
  %v793 = vadd.f32 %v791, %v792
  %v794 = vsel %vm686, %v561, 0.0
  %v795 = vadd.f32 %v793, %v794
  %v796 = vsel %vm686, %v564, 0.0
  %v797 = vadd.f32 %v795, %v796
  %v798 = vsel %vm686, %v567, 0.0
  %v799 = vadd.f32 %v797, %v798
  %v800 = vsel %vm686, %v570, 0.0
  %v801 = vadd.f32 %v799, %v800
  %v802 = vsel %vm686, %v573, 0.0
  %v803 = vadd.f32 %v801, %v802
  %v804 = vsel %vm686, %v576, 0.0
  %v805 = vadd.f32 %v803, %v804
  %v806 = vsel %vm686, %v579, 0.0
  %v807 = vadd.f32 %v805, %v806
  %v808 = vsel %vm686, %v582, 0.0
  %v809 = vadd.f32 %v807, %v808
  %v810 = vsel %vm686, %v585, 0.0
  %v811 = vadd.f32 %v809, %v810
  %v812 = vsel %vm686, %v588, 0.0
  %v813 = vadd.f32 %v811, %v812
  %v814 = vsel %vm686, %v591, 0.0
  %v815 = vadd.f32 %v813, %v814
  %v816 = vsel %vm686, %v594, 0.0
  %v817 = vadd.f32 %v815, %v816
  %v818 = vsel %vm686, %v597, 0.0
  %v819 = vadd.f32 %v817, %v818
  %v820 = vsel %vm686, %v600, 0.0
  %v821 = vadd.f32 %v819, %v820
  %v822 = vsel %vm686, %v603, 0.0
  %v823 = vadd.f32 %v821, %v822
  %v824 = vsel %vm686, %v606, 0.0
  %v825 = vadd.f32 %v823, %v824
  %v826 = vsel %vm686, %v609, 0.0
  %v827 = vadd.f32 %v825, %v826
  %v828 = vsel %vm686, %v612, 0.0
  %v829 = vadd.f32 %v827, %v828
  %v830 = vsel %vm686, %v615, 0.0
  %v831 = vadd.f32 %v829, %v830
  %v832 = vsel %vm686, %v618, 0.0
  %v833 = vadd.f32 %v831, %v832
  %v834 = vsel %vm686, %v621, 0.0
  %v835 = vadd.f32 %v833, %v834
  %v836 = vsel %vm686, %v624, 0.0
  %v837 = vadd.f32 %v835, %v836
  %v838 = vsel %vm686, %v627, 0.0
  %v839 = vadd.f32 %v837, %v838
  %v840 = vsel %vm686, %v630, 0.0
  %v841 = vadd.f32 %v839, %v840
  %v842 = vsel %vm686, %v633, 0.0
  %v843 = vadd.f32 %v841, %v842
  %v844 = vsel %vm686, %v636, 0.0
  %v845 = vadd.f32 %v843, %v844
  %v846 = vsel %vm686, %v639, 0.0
  %v847 = vadd.f32 %v845, %v846
  %v848 = vsel %vm686, %v642, 0.0
  %v849 = vadd.f32 %v847, %v848
  %v850 = vsel %vm686, %v645, 0.0
  %v851 = vadd.f32 %v849, %v850
  %v852 = vsel %vm686, %v648, 0.0
  %v853 = vadd.f32 %v851, %v852
  %v854 = vsel %vm686, %v651, 0.0
  %v855 = vadd.f32 %v853, %v854
  %v856 = vsel %vm686, %v654, 0.0
  %v857 = vadd.f32 %v855, %v856
  %v858 = vsel %vm686, %v657, 0.0
  %v859 = vadd.f32 %v857, %v858
  %v860 = vsel %vm686, %v660, 0.0
  %v861 = vadd.f32 %v859, %v860
  %v862 = vsel %vm686, %v663, 0.0
  %v863 = vadd.f32 %v861, %v862
  %v864 = vsel %vm686, %v666, 0.0
  %v865 = vadd.f32 %v863, %v864
  %v866 = vsel %vm686, %v669, 0.0
  %v867 = vadd.f32 %v865, %v866
  %v868 = vsel %vm686, %v672, 0.0
  %v869 = vadd.f32 %v867, %v868
  %v870 = vsel %vm686, %v675, 0.0
  %v871 = vadd.f32 %v869, %v870
  %v872 = vsel %vm686, %v678, 0.0
  %v873 = vadd.f32 %v871, %v872
  %v874 = vsel %vm686, %v681, 0.0
  %v875 = vadd.f32 %v873, %v874
  %v876 = vsel %vm686, %v684, 0.0
  %v877 = vadd.f32 %v875, %v876
  %v878 = vrot.slane %v877, 4
  %v879 = vadd.f32 %v877, %v878
  %v880 = vrot.slane %v879, 2
  %v881 = vadd.f32 %v879, %v880
  %v882 = vrot.slane %v881, 1
  %v883 = vadd.f32 %v881, %v882
  %v884 = vmul.f32 %v495, %v495
  %v885 = vmul.f32 %v498, %v498
  %v886 = vmul.f32 %v501, %v501
  %v887 = vmul.f32 %v504, %v504
  %v888 = vmul.f32 %v507, %v507
  %v889 = vmul.f32 %v510, %v510
  %v890 = vmul.f32 %v513, %v513
  %v891 = vmul.f32 %v516, %v516
  %v892 = vmul.f32 %v519, %v519
  %v893 = vmul.f32 %v522, %v522
  %v894 = vmul.f32 %v525, %v525
  %v895 = vmul.f32 %v528, %v528
  %v896 = vmul.f32 %v531, %v531
  %v897 = vmul.f32 %v534, %v534
  %v898 = vmul.f32 %v537, %v537
  %v899 = vmul.f32 %v540, %v540
  %v900 = vmul.f32 %v543, %v543
  %v901 = vmul.f32 %v546, %v546
  %v902 = vmul.f32 %v549, %v549
  %v903 = vmul.f32 %v552, %v552
  %v904 = vmul.f32 %v555, %v555
  %v905 = vmul.f32 %v558, %v558
  %v906 = vmul.f32 %v561, %v561
  %v907 = vmul.f32 %v564, %v564
  %v908 = vmul.f32 %v567, %v567
  %v909 = vmul.f32 %v570, %v570
  %v910 = vmul.f32 %v573, %v573
  %v911 = vmul.f32 %v576, %v576
  %v912 = vmul.f32 %v579, %v579
  %v913 = vmul.f32 %v582, %v582
  %v914 = vmul.f32 %v585, %v585
  %v915 = vmul.f32 %v588, %v588
  %v916 = vmul.f32 %v591, %v591
  %v917 = vmul.f32 %v594, %v594
  %v918 = vmul.f32 %v597, %v597
  %v919 = vmul.f32 %v600, %v600
  %v920 = vmul.f32 %v603, %v603
  %v921 = vmul.f32 %v606, %v606
  %v922 = vmul.f32 %v609, %v609
  %v923 = vmul.f32 %v612, %v612
  %v924 = vmul.f32 %v615, %v615
  %v925 = vmul.f32 %v618, %v618
  %v926 = vmul.f32 %v621, %v621
  %v927 = vmul.f32 %v624, %v624
  %v928 = vmul.f32 %v627, %v627
  %v929 = vmul.f32 %v630, %v630
  %v930 = vmul.f32 %v633, %v633
  %v931 = vmul.f32 %v636, %v636
  %v932 = vmul.f32 %v639, %v639
  %v933 = vmul.f32 %v642, %v642
  %v934 = vmul.f32 %v645, %v645
  %v935 = vmul.f32 %v648, %v648
  %v936 = vmul.f32 %v651, %v651
  %v937 = vmul.f32 %v654, %v654
  %v938 = vmul.f32 %v657, %v657
  %v939 = vmul.f32 %v660, %v660
  %v940 = vmul.f32 %v663, %v663
  %v941 = vmul.f32 %v666, %v666
  %v942 = vmul.f32 %v669, %v669
  %v943 = vmul.f32 %v672, %v672
  %v944 = vmul.f32 %v675, %v675
  %v945 = vmul.f32 %v678, %v678
  %v946 = vmul.f32 %v681, %v681
  %v947 = vmul.f32 %v684, %v684
  %v948 = vsel %vm686, %v884, 0.0
  %v949 = vsel %vm686, %v885, 0.0
  %v950 = vadd.f32 %v948, %v949
  %v951 = vsel %vm686, %v886, 0.0
  %v952 = vadd.f32 %v950, %v951
  %v953 = vsel %vm686, %v887, 0.0
  %v954 = vadd.f32 %v952, %v953
  %v955 = vsel %vm686, %v888, 0.0
  %v956 = vadd.f32 %v954, %v955
  %v957 = vsel %vm686, %v889, 0.0
  %v958 = vadd.f32 %v956, %v957
  %v959 = vsel %vm686, %v890, 0.0
  %v960 = vadd.f32 %v958, %v959
  %v961 = vsel %vm686, %v891, 0.0
  %v962 = vadd.f32 %v960, %v961
  %v963 = vsel %vm686, %v892, 0.0
  %v964 = vadd.f32 %v962, %v963
  %v965 = vsel %vm686, %v893, 0.0
  %v966 = vadd.f32 %v964, %v965
  %v967 = vsel %vm686, %v894, 0.0
  %v968 = vadd.f32 %v966, %v967
  %v969 = vsel %vm686, %v895, 0.0
  %v970 = vadd.f32 %v968, %v969
  %v971 = vsel %vm686, %v896, 0.0
  %v972 = vadd.f32 %v970, %v971
  %v973 = vsel %vm686, %v897, 0.0
  %v974 = vadd.f32 %v972, %v973
  %v975 = vsel %vm686, %v898, 0.0
  %v976 = vadd.f32 %v974, %v975
  %v977 = vsel %vm686, %v899, 0.0
  %v978 = vadd.f32 %v976, %v977
  %v979 = vsel %vm686, %v900, 0.0
  %v980 = vadd.f32 %v978, %v979
  %v981 = vsel %vm686, %v901, 0.0
  %v982 = vadd.f32 %v980, %v981
  %v983 = vsel %vm686, %v902, 0.0
  %v984 = vadd.f32 %v982, %v983
  %v985 = vsel %vm686, %v903, 0.0
  %v986 = vadd.f32 %v984, %v985
  %v987 = vsel %vm686, %v904, 0.0
  %v988 = vadd.f32 %v986, %v987
  %v989 = vsel %vm686, %v905, 0.0
  %v990 = vadd.f32 %v988, %v989
  %v991 = vsel %vm686, %v906, 0.0
  %v992 = vadd.f32 %v990, %v991
  %v993 = vsel %vm686, %v907, 0.0
  %v994 = vadd.f32 %v992, %v993
  %v995 = vsel %vm686, %v908, 0.0
  %v996 = vadd.f32 %v994, %v995
  %v997 = vsel %vm686, %v909, 0.0
  %v998 = vadd.f32 %v996, %v997
  %v999 = vsel %vm686, %v910, 0.0
  %v1000 = vadd.f32 %v998, %v999
  %v1001 = vsel %vm686, %v911, 0.0
  %v1002 = vadd.f32 %v1000, %v1001
  %v1003 = vsel %vm686, %v912, 0.0
  %v1004 = vadd.f32 %v1002, %v1003
  %v1005 = vsel %vm686, %v913, 0.0
  %v1006 = vadd.f32 %v1004, %v1005
  %v1007 = vsel %vm686, %v914, 0.0
  %v1008 = vadd.f32 %v1006, %v1007
  %v1009 = vsel %vm686, %v915, 0.0
  %v1010 = vadd.f32 %v1008, %v1009
  %v1011 = vsel %vm686, %v916, 0.0
  %v1012 = vadd.f32 %v1010, %v1011
  %v1013 = vsel %vm686, %v917, 0.0
  %v1014 = vadd.f32 %v1012, %v1013
  %v1015 = vsel %vm686, %v918, 0.0
  %v1016 = vadd.f32 %v1014, %v1015
  %v1017 = vsel %vm686, %v919, 0.0
  %v1018 = vadd.f32 %v1016, %v1017
  %v1019 = vsel %vm686, %v920, 0.0
  %v1020 = vadd.f32 %v1018, %v1019
  %v1021 = vsel %vm686, %v921, 0.0
  %v1022 = vadd.f32 %v1020, %v1021
  %v1023 = vsel %vm686, %v922, 0.0
  %v1024 = vadd.f32 %v1022, %v1023
  %v1025 = vsel %vm686, %v923, 0.0
  %v1026 = vadd.f32 %v1024, %v1025
  %v1027 = vsel %vm686, %v924, 0.0
  %v1028 = vadd.f32 %v1026, %v1027
  %v1029 = vsel %vm686, %v925, 0.0
  %v1030 = vadd.f32 %v1028, %v1029
  %v1031 = vsel %vm686, %v926, 0.0
  %v1032 = vadd.f32 %v1030, %v1031
  %v1033 = vsel %vm686, %v927, 0.0
  %v1034 = vadd.f32 %v1032, %v1033
  %v1035 = vsel %vm686, %v928, 0.0
  %v1036 = vadd.f32 %v1034, %v1035
  %v1037 = vsel %vm686, %v929, 0.0
  %v1038 = vadd.f32 %v1036, %v1037
  %v1039 = vsel %vm686, %v930, 0.0
  %v1040 = vadd.f32 %v1038, %v1039
  %v1041 = vsel %vm686, %v931, 0.0
  %v1042 = vadd.f32 %v1040, %v1041
  %v1043 = vsel %vm686, %v932, 0.0
  %v1044 = vadd.f32 %v1042, %v1043
  %v1045 = vsel %vm686, %v933, 0.0
  %v1046 = vadd.f32 %v1044, %v1045
  %v1047 = vsel %vm686, %v934, 0.0
  %v1048 = vadd.f32 %v1046, %v1047
  %v1049 = vsel %vm686, %v935, 0.0
  %v1050 = vadd.f32 %v1048, %v1049
  %v1051 = vsel %vm686, %v936, 0.0
  %v1052 = vadd.f32 %v1050, %v1051
  %v1053 = vsel %vm686, %v937, 0.0
  %v1054 = vadd.f32 %v1052, %v1053
  %v1055 = vsel %vm686, %v938, 0.0
  %v1056 = vadd.f32 %v1054, %v1055
  %v1057 = vsel %vm686, %v939, 0.0
  %v1058 = vadd.f32 %v1056, %v1057
  %v1059 = vsel %vm686, %v940, 0.0
  %v1060 = vadd.f32 %v1058, %v1059
  %v1061 = vsel %vm686, %v941, 0.0
  %v1062 = vadd.f32 %v1060, %v1061
  %v1063 = vsel %vm686, %v942, 0.0
  %v1064 = vadd.f32 %v1062, %v1063
  %v1065 = vsel %vm686, %v943, 0.0
  %v1066 = vadd.f32 %v1064, %v1065
  %v1067 = vsel %vm686, %v944, 0.0
  %v1068 = vadd.f32 %v1066, %v1067
  %v1069 = vsel %vm686, %v945, 0.0
  %v1070 = vadd.f32 %v1068, %v1069
  %v1071 = vsel %vm686, %v946, 0.0
  %v1072 = vadd.f32 %v1070, %v1071
  %v1073 = vsel %vm686, %v947, 0.0
  %v1074 = vadd.f32 %v1072, %v1073
  %v1075 = vrot.slane %v1074, 4
  %v1076 = vadd.f32 %v1074, %v1075
  %v1077 = vrot.slane %v1076, 2
  %v1078 = vadd.f32 %v1076, %v1077
  %v1079 = vrot.slane %v1078, 1
  %v1080 = vadd.f32 %v1078, %v1079
  %vm1081 = vcmask 1040384
  %v1082 = vsel %vm1081, %v883, %v1080
  %vm1083 = vcmask 123904
  %1084 = vst.msk [vmem:[%s5] sm:$0x3] %vm1083, %v1082
  // Predicated region
  $region18: #{_lambda_.6} parent=0 // pred_check
    _
  $region19: #{_lambda_.6} parent=0 // pred_check_branch
    %1086 = sbr.rel (0) target = $region21
  $region20: #{_lambda_.6} parent=0 // pred_region
    _
  $region21: #{_lambda_.6} parent=0 // pred_fallthru
    _
  // Predicated region
  $region22: #{_lambda_.6} parent=0 // pred_check
    _
  $region23: #{_lambda_.6} parent=0 // pred_check_branch
    %1088 = sbr.rel (0) target = $region25
  $region24: #{_lambda_.6} parent=0 // pred_region
    _
  $region25: #{_lambda_.6} parent=0 // pred_fallthru
    _
  // Predicated region
  $region26: #{_lambda_.6} parent=0 // pred_check
    _
  $region27: #{_lambda_.6} parent=0 // pred_check_branch
    %1090 = sbr.rel (0) target = $region29
  $region28: #{_lambda_.6} parent=0 // pred_region
    _
  $region29: #{_lambda_.6} parent=0 // pred_fallthru
    _
  // Predicated region
  $region30: #{_lambda_.6} parent=0 // pred_check
    _
  $region31: #{_lambda_.6} parent=0 // pred_check_branch
    %1092 = sbr.rel (0) target = $region33
  $region32: #{_lambda_.6} parent=0 // pred_region
    _
  $region33: #{_lambda_.6} parent=0 // pred_fallthru
    _

// kernel: _lambda_.7
$region0: #{_lambda_.7}
  #allocation0 [shape = 'u32[]', space=smem, size = 0x4, offset = 0x4, fixed_abs, tag = 'smem constant byte address 0x4 - core index']
  #allocation1 [shape = 'u32[72,128]{1,0:T(1,128)}', space=vmem, size = 0x9000, scoped, tag = 'internal scratch']
  %s0 = inlined_call_operand.vmem [shape: f32[64,128], index: 0, kind: input, shape index: {}]
  %s1 = inlined_call_operand.vmem [shape: f32[1,128], index: 1, kind: input, shape index: {}]
  %s2 = inlined_call_operand.vmem [shape: f32[1,128], index: 2, kind: input, shape index: {}]
  %s3 = inlined_call_operand.vmem [shape: f32[64,128], index: 3, kind: output, shape index: {}]
  %s4 = sld [smem:[#allocation0]]
  $region22: #{_lambda_.7} parent=0
    _
  %s6 = ssub.s32 1, %s4
  %s7 = scalar_select 0, %s6, %s4
  // Predicated region
  $region2: #{_lambda_.7} parent=0 // pred_check
    _
  $region3: #{_lambda_.7} parent=0 // pred_check_branch
    %9 = sbr.rel (0) target = $region5
  $region4: #{_lambda_.7} parent=0 // pred_region
    _
  $region5: #{_lambda_.7} parent=0 // pred_fallthru
    _
  // Predicated region
  $region6: #{_lambda_.7} parent=0 // pred_check
    _
  $region7: #{_lambda_.7} parent=0 // pred_check_branch
    %11 = sbr.rel (0) target = $region9
  $region8: #{_lambda_.7} parent=0 // pred_region
    _
  $region9: #{_lambda_.7} parent=0 // pred_fallthru
    _
  // Predicated region
  $region10: #{_lambda_.7} parent=0 // pred_check
    _
  $region11: #{_lambda_.7} parent=0 // pred_check_branch
    %13 = sbr.rel (0) target = $region13
  $region12: #{_lambda_.7} parent=0 // pred_region
    _
  $region13: #{_lambda_.7} parent=0 // pred_fallthru
    _
  %v14 = vld [vmem:[%s0] sm:$0xff]
  %v15 = vld [vmem:[%s0 + $0x8] sm:$0xff]
  %v16 = vld [vmem:[%s0 + $0x10] sm:$0xff]
  %v17 = vld [vmem:[%s0 + $0x18] sm:$0xff]
  %v18 = vld [vmem:[%s0 + $0x20] sm:$0xff]
  %v19 = vld [vmem:[%s0 + $0x28] sm:$0xff]
  %v20 = vld [vmem:[%s0 + $0x30] sm:$0xff]
  %v21 = vld [vmem:[%s0 + $0x38] sm:$0xff]
  %v22 = vld [vmem:[%s1] sm:$0x1]
  %v24 = vperm.slane %v22, 0
  %v26 = vmul.f32 %v14, %v24
  %v27 = vmul.f32 %v15, %v24
  %v28 = vmul.f32 %v16, %v24
  %v29 = vmul.f32 %v17, %v24
  %v30 = vmul.f32 %v18, %v24
  %v31 = vmul.f32 %v19, %v24
  %v32 = vmul.f32 %v20, %v24
  %v33 = vmul.f32 %v21, %v24
  %v34 = vld [vmem:[%s2] sm:$0x1]
  %v36 = vperm.slane %v34, 0
  %v38 = vadd.f32 %v26, %v36
  %v39 = vadd.f32 %v27, %v36
  %v40 = vadd.f32 %v28, %v36
  %v41 = vadd.f32 %v29, %v36
  %v42 = vadd.f32 %v30, %v36
  %v43 = vadd.f32 %v31, %v36
  %v44 = vadd.f32 %v32, %v36
  %v45 = vadd.f32 %v33, %v36
  %v46 = vmax.f32 %v38, 0.0
  %v47 = vmax.f32 %v39, 0.0
  %v48 = vmax.f32 %v40, 0.0
  %v49 = vmax.f32 %v41, 0.0
  %v50 = vmax.f32 %v42, 0.0
  %v51 = vmax.f32 %v43, 0.0
  %v52 = vmax.f32 %v44, 0.0
  %v53 = vmax.f32 %v45, 0.0
  %54 = vst [vmem:[%s3] sm:$0xff] %v46
  %55 = vst [vmem:[%s3 + $0x8] sm:$0xff] %v47
  %56 = vst [vmem:[%s3 + $0x10] sm:$0xff] %v48
  %57 = vst [vmem:[%s3 + $0x18] sm:$0xff] %v49
  %58 = vst [vmem:[%s3 + $0x20] sm:$0xff] %v50
  %59 = vst [vmem:[%s3 + $0x28] sm:$0xff] %v51
  %60 = vst [vmem:[%s3 + $0x30] sm:$0xff] %v52
  %61 = vst [vmem:[%s3 + $0x38] sm:$0xff] %v53
  // Predicated region
  $region14: #{_lambda_.7} parent=0 // pred_check
    _
  $region15: #{_lambda_.7} parent=0 // pred_check_branch
    %63 = sbr.rel (0) target = $region17
  $region16: #{_lambda_.7} parent=0 // pred_region
    _
  $region17: #{_lambda_.7} parent=0 // pred_fallthru
    _
  // Predicated region
  $region18: #{_lambda_.7} parent=0 // pred_check
    _
  $region19: #{_lambda_.7} parent=0 // pred_check_branch
    %65 = sbr.rel (0) target = $region21
  $region20: #{_lambda_.7} parent=0 // pred_region
    _
  $region21: #{_lambda_.7} parent=0 // pred_fallthru
    _

</llo_original>
